<compile_context>
chip_gen: v5e
topology: v5e:2x2
jax: 0.10.0
libtpu: 0.0.40
codegen_flags: <defaults>
</compile_context>

<pallas_src>
import jax
import jax.numpy as jnp
from jax.experimental import pallas as pl
from jax.experimental.pallas import tpu as pltpu


def _round_up(x, m):
    return (x + m - 1) // m * m


def _vmem_capacity_bytes():
    try:
        return int(pltpu.get_tpu_info().vmem_capacity_bytes)
    except Exception:
        return 128 << 20  # v5e/v6e physical VMEM; conservative default


def _verb_given_obj_app_kernel(x_ref, w1_ref, b1_ref, w2_ref, b2_ref, o_ref):
    x = x_ref[...]                                    # (tb, in_dim), f32 or bf16
    # Zero-row mask from exactly the values the matmul consumes, so the
    # "all-zero input row -> all-zero scores" guarantee is airtight for any dtype.
    row_nonzero = jnp.any(x != 0, axis=-1, keepdims=True)       # (tb, 1)

    # Layer 1: Linear + ReLU (bf16 MXU operands, f32 accumulation).
    h = jnp.dot(x.astype(jnp.bfloat16), w1_ref[...],
                preferred_element_type=jnp.float32) + b1_ref[...]
    h = jnp.maximum(h, 0.0)

    # Layer 2: Linear (Identity output activation).
    s = jnp.dot(h.astype(jnp.bfloat16), w2_ref[...],
                preferred_element_type=jnp.float32) + b2_ref[...]

    o_ref[...] = jnp.where(row_nonzero, s, 0.0).astype(o_ref.dtype)


def verb_given_object_appearance(x, w1, b1, w2, b2, *, tb=None,
                                 out_dtype=jnp.float32):
    """x: (B, in_dim) float (bf16 recommended); w1: (in_dim, hidden); w2: (hidden, out_dim).

    Returns (B, out_dim) factor scores; input rows that are all-zero give zero rows.
    """
    B, in_dim = x.shape
    hidden = w1.shape[1]
    out_dim = w2.shape[1]

    hp = _round_up(hidden, 128)
    out_p = _round_up(out_dim, 128)

    # Pad only the (small, one-time) weights/biases so MXU tiles are full and the
    # output store is lane-dense.  x itself is never padded or copied.
    w1_p = jnp.pad(w1, ((0, 0), (0, hp - hidden))).astype(jnp.bfloat16)
    b1_p = jnp.pad(jnp.reshape(b1, (1, -1)),
                   ((0, 0), (0, hp - hidden))).astype(jnp.float32)
    w2_p = jnp.pad(w2, ((0, hp - hidden), (0, out_p - out_dim))).astype(jnp.bfloat16)
    b2_p = jnp.pad(jnp.reshape(b2, (1, -1)),
                   ((0, 0), (0, out_p - out_dim))).astype(jnp.float32)

    x_bytes = jnp.dtype(x.dtype).itemsize
    out_bytes = jnp.dtype(out_dtype).itemsize

    # VMEM accounting (bytes):
    #   per-batch-row: double-buffered x tile + double-buffered out tile + f32
    #   working set (hidden acts, scores) + in-kernel bf16 copy of x
    per_row = (2 * in_dim * x_bytes + 2 * out_p * out_bytes
               + hp * 4 + out_p * 4 + in_dim * 2)
    #   resident weights/biases: single-buffered (Buffered(1)); fallback doubles them
    w_bytes = (in_dim * hp + hp * out_p) * 2 + (hp + out_p) * 4
    fixed_1 = w_bytes
    fixed_2 = 2 * w_bytes

    vmem_cap = _vmem_capacity_bytes()
    budget = min((vmem_cap * 3) // 4, 96 << 20)      # v7x: 48 MiB, v5e/v6e: 96 MiB

    sub = 16  # sublane multiple satisfying both bf16 (16) and f32 (8) row tiles

    if fixed_1 + sub * per_row + (4 << 20) > budget:
        # TODO(synk): for very large RCNN-feature weights, tile hidden/out with a
        # second 'arbitrary' grid axis + f32 accumulator instead of keeping both
        # weight matrices fully resident (not needed for these model sizes).
        raise ValueError("MLP weights too large for resident-weight kernel")

    if tb is None:
        avail = budget - fixed_1 - (4 << 20)
        # Aim for ~1 MiB x DMA per grid step to amortize per-step overhead.
        tb = max(512, (1 << 20) // max(in_dim * x_bytes, 1))
        tb = min(tb, avail // per_row, 4096)
    tb = int(tb)
    if B <= sub:
        tb = B                                        # single full-extent batch block
    else:
        # Guarantee >= 2 grid steps so ('parallel',) can shard across v7x's 2 TCs.
        tb = min(tb, _round_up(-(-B // 2), sub))
        tb = min(tb, _round_up(B, sub))
        if tb >= 256:
            tb = (tb // 256) * 256                    # MXU-friendly M on v6e/v7x
        tb = max(sub, _round_up(tb, sub))

    grid = (pl.cdiv(B, tb),)

    vmem_est = fixed_2 + tb * per_row                 # conservative: covers fallback
    vmem_limit = int(min(int(vmem_cap * 0.85),
                         max(vmem_est + (8 << 20), 16 << 20)))

    flops = 2 * B * (in_dim * hp + hp * out_p)
    bytes_accessed = (B * in_dim * x_bytes + w1_p.size * 2 + w2_p.size * 2
                      + b1_p.size * 4 + b2_p.size * 4 + B * out_p * out_bytes)
    cost = pl.CostEstimate(flops=flops, transcendentals=0,
                           bytes_accessed=bytes_accessed)

    def _call(single_buffer_weights):
        w_kw = ({"pipeline_mode": pl.Buffered(1)}
                if single_buffer_weights else {})
        in_specs = [
            pl.BlockSpec((tb, in_dim), lambda i: (i, 0)),          # x tile (streamed)
            pl.BlockSpec((in_dim, hp), lambda i: (0, 0), **w_kw),  # W1 (resident bf16)
            pl.BlockSpec((1, hp), lambda i: (0, 0), **w_kw),       # b1
            pl.BlockSpec((hp, out_p), lambda i: (0, 0), **w_kw),   # W2 (resident bf16)
            pl.BlockSpec((1, out_p), lambda i: (0, 0), **w_kw),    # b2
        ]
        out_spec = pl.BlockSpec((tb, out_p), lambda i: (i, 0))     # lane-dense store
        return pl.pallas_call(
            _verb_given_obj_app_kernel,
            out_shape=jax.ShapeDtypeStruct((B, out_p), out_dtype),
            grid_spec=pltpu.PrefetchScalarGridSpec(
                num_scalar_prefetch=0,
                grid=grid,
                in_specs=in_specs,
                out_specs=out_spec,
            ),
            compiler_params=pltpu.CompilerParams(
                dimension_semantics=("parallel",),
                vmem_limit_bytes=vmem_limit,
            ),
            cost_estimate=cost,
        )(x, w1_p, b1_p, w2_p, b2_p)

    try:
        out = _call(True)
    except Exception:
        # Older JAX without BlockSpec(pipeline_mode=...): default double-buffering.
        out = _call(False)

    if out_p != out_dim:
        out = out[:, :out_dim]
    return out


def _reference(x, w1, b1, w2, b2):
    h = jnp.maximum(x @ w1 + jnp.reshape(b1, (1, -1)), 0.0)
    s = h @ w2 + jnp.reshape(b2, (1, -1))
    mask = jnp.any(x != 0, axis=-1, keepdims=True)
    return jnp.where(mask, s, 0.0)


if __name__ == "__main__":
    # Small synthetic dims consistent with the module (appearance feats -> verb scores).
    # OUT_DIM=117 (verb classes) exercises the lane-padded / sliced output path, and
    # B=48 with tb=32 exercises the multi-step grid + ragged last batch block.
    B, IN_DIM, HIDDEN, OUT_DIM = 48, 128, 256, 117

    key = jax.random.PRNGKey(0)
    kx, kw1, kb1, kw2, kb2 = jax.random.split(key, 5)

    x = jax.random.normal(kx, (B, IN_DIM), dtype=jnp.float32)
    # Make one row all-zero to exercise the masking path of forward().
    x = x.at[3].set(0.0)

    # Deterministic synthetic MLP parameters.
    w1 = jax.random.normal(kw1, (IN_DIM, HIDDEN), dtype=jnp.float32) * 0.02
    b1 = jax.random.normal(kb1, (HIDDEN,), dtype=jnp.float32) * 0.01
    w2 = jax.random.normal(kw2, (HIDDEN, OUT_DIM), dtype=jnp.float32) * 0.02
    b2 = jax.random.normal(kb2, (OUT_DIM,), dtype=jnp.float32) * 0.01

    # Stream x in bf16 (halves the dominant HBM read; the in-kernel mask is computed
    # from the same bf16 values, so zero rows stay exactly zero).
    x_bf16 = x.astype(jnp.bfloat16)

    out = verb_given_object_appearance(x_bf16, w1, b1, w2, b2)
    out = jax.block_until_ready(out)

    ref = _reference(x_bf16.astype(jnp.float32), w1, b1, w2, b2)
    assert out.shape == (B, OUT_DIM)
    # bf16 MXU operands with f32 accumulation -> loosened tolerance vs f32 reference.
    assert jnp.allclose(out, ref, atol=2e-2, rtol=2e-2), "mismatch vs reference"
    assert jnp.all(out[3] == 0.0), "all-zero input row must produce zero scores"

    print("KERNEL_OK")
</pallas_src>

<mosaic_0001>
module attributes {stable_mosaic.version = 11 : i64} {
  func.func @_verb_given_obj_app_kernel(%arg0: i32, %arg1: memref<32x128xbf16, #tpu.memory_space<vmem>>, %arg2: memref<128x256xbf16, #tpu.memory_space<vmem>>, %arg3: memref<1x256xf32, #tpu.memory_space<vmem>>, %arg4: memref<256x128xbf16, #tpu.memory_space<vmem>>, %arg5: memref<1x128xf32, #tpu.memory_space<vmem>>, %arg6: memref<32x128xf32, #tpu.memory_space<vmem>>) attributes {dimension_semantics = [#tpu.dimension_semantics<parallel>], iteration_bounds = array<i64: 2>, scalar_prefetch = 0 : i64, scratch_operands = 0 : i64, tpu.core_type = #tpu.core_type<tc>, window_params = [{transform_indices = @transform_0, window_bounds = array<i64: 32, 128>}, {pipeline_mode = #tpu.pipeline_mode<synchronous>, transform_indices = @transform_1, window_bounds = array<i64: 128, 256>}, {pipeline_mode = #tpu.pipeline_mode<synchronous>, transform_indices = @transform_2, window_bounds = array<i64: 1, 256>}, {pipeline_mode = #tpu.pipeline_mode<synchronous>, transform_indices = @transform_3, window_bounds = array<i64: 256, 128>}, {pipeline_mode = #tpu.pipeline_mode<synchronous>, transform_indices = @transform_4, window_bounds = array<i64: 1, 128>}, {transform_indices = @transform_5, window_bounds = array<i64: 32, 128>}]} {
    %c0 = arith.constant 0 : index
    %c0_0 = arith.constant 0 : index
    %0 = vector.load %arg1[%c0, %c0_0] : memref<32x128xbf16, #tpu.memory_space<vmem>>, vector<32x128xbf16>
    %cst = arith.constant 0.000000e+00 : bf16
    %1 = vector.broadcast %cst : bf16 to vector<32x128xbf16>
    %2 = arith.cmpf one, %0, %1 : vector<32x128xbf16>
    %cst_1 = arith.constant 1.000000e+00 : f32
    %cst_2 = arith.constant 0.000000e+00 : f32
    %3 = vector.broadcast %cst_1 : f32 to vector<32x128xf32>
    %4 = vector.broadcast %cst_2 : f32 to vector<32x128xf32>
    %5 = arith.select %2, %3, %4 : vector<32x128xi1>, vector<32x128xf32>
    %cst_3 = arith.constant dense<0xFF800000> : vector<32xf32>
    %6 = vector.multi_reduction <maximumf>, %5, %cst_3 [1] : vector<32x128xf32> to vector<32xf32>
    %cst_4 = arith.constant 0.000000e+00 : f32
    %7 = vector.broadcast %cst_4 : f32 to vector<32xf32>
    %8 = arith.cmpf ogt, %6, %7 : vector<32xf32>
    %9 = vector.shape_cast %8 : vector<32xi1> to vector<32x1xi1>
    %c0_5 = arith.constant 0 : index
    %c0_6 = arith.constant 0 : index
    %10 = vector.load %arg2[%c0_5, %c0_6] : memref<128x256xbf16, #tpu.memory_space<vmem>>, vector<128x256xbf16>
    %cst_7 = arith.constant dense<0.000000e+00> : vector<32x256xf32>
    %11 = tpu.matmul %0, %10, %cst_7 {dimension_numbers = #tpu.dot_dimension_numbers<[1], [0], [0], [1], [0, 0, 1, 1], [], []>} : vector<32x128xbf16>, vector<128x256xbf16>, vector<32x256xf32> -> vector<32x256xf32>
    %c0_8 = arith.constant 0 : index
    %c0_9 = arith.constant 0 : index
    %12 = vector.load %arg3[%c0_8, %c0_9] : memref<1x256xf32, #tpu.memory_space<vmem>>, vector<1x256xf32>
    %13 = vector.broadcast %12 : vector<1x256xf32> to vector<32x256xf32>
    %14 = arith.addf %11, %13 : vector<32x256xf32>
    %cst_10 = arith.constant 0.000000e+00 : f32
    %15 = vector.broadcast %cst_10 : f32 to vector<32x256xf32>
    %16 = arith.maximumf %14, %15 : vector<32x256xf32>
    %17 = arith.truncf %16 : vector<32x256xf32> to vector<32x256xbf16>
    %c0_11 = arith.constant 0 : index
    %c0_12 = arith.constant 0 : index
    %18 = vector.load %arg4[%c0_11, %c0_12] : memref<256x128xbf16, #tpu.memory_space<vmem>>, vector<256x128xbf16>
    %cst_13 = arith.constant dense<0.000000e+00> : vector<32x128xf32>
    %19 = tpu.matmul %17, %18, %cst_13 {dimension_numbers = #tpu.dot_dimension_numbers<[1], [0], [0], [1], [0, 0, 1, 1], [], []>} : vector<32x256xbf16>, vector<256x128xbf16>, vector<32x128xf32> -> vector<32x128xf32>
    %c0_14 = arith.constant 0 : index
    %c0_15 = arith.constant 0 : index
    %20 = vector.load %arg5[%c0_14, %c0_15] : memref<1x128xf32, #tpu.memory_space<vmem>>, vector<1x128xf32>
    %21 = vector.broadcast %20 : vector<1x128xf32> to vector<32x128xf32>
    %22 = arith.addf %19, %21 : vector<32x128xf32>
    %cst_16 = arith.constant 0.000000e+00 : f32
    %23 = vector.shape_cast %9 : vector<32x1xi1> to vector<32x1xi1>
    %24 = vector.broadcast %23 : vector<32x1xi1> to vector<32x128xi1>
    %25 = vector.broadcast %cst_16 : f32 to vector<32x128xf32>
    %26 = arith.select %24, %22, %25 : vector<32x128xi1>, vector<32x128xf32>
    %c0_17 = arith.constant 0 : index
    %c0_18 = arith.constant 0 : index
    %27 = vector.load %arg6[%c0_17, %c0_18] : memref<32x128xf32, #tpu.memory_space<vmem>>, vector<32x128xf32>
    tpu.vector_store %arg6[%c0_17, %c0_18], %26 {strides = array<i32>} : memref<32x128xf32, #tpu.memory_space<vmem>>, vector<32x128xf32>,
    return
  }
  func.func @transform_0(%arg0: i32) -> (i32, i32) {
    %c0_i32 = arith.constant 0 : i32
    %c0_i32_0 = arith.constant 0 : i32
    return %arg0, %c0_i32 : i32, i32
  }
  func.func @transform_1(%arg0: i32) -> (i32, i32) {
    %c0_i32 = arith.constant 0 : i32
    %c0_i32_0 = arith.constant 0 : i32
    %c0_i32_1 = arith.constant 0 : i32
    return %c0_i32, %c0_i32_0 : i32, i32
  }
  func.func @transform_2(%arg0: i32) -> (i32, i32) {
    %c0_i32 = arith.constant 0 : i32
    %c0_i32_0 = arith.constant 0 : i32
    %c0_i32_1 = arith.constant 0 : i32
    return %c0_i32, %c0_i32_0 : i32, i32
  }
  func.func @transform_3(%arg0: i32) -> (i32, i32) {
    %c0_i32 = arith.constant 0 : i32
    %c0_i32_0 = arith.constant 0 : i32
    %c0_i32_1 = arith.constant 0 : i32
    return %c0_i32, %c0_i32_0 : i32, i32
  }
  func.func @transform_4(%arg0: i32) -> (i32, i32) {
    %c0_i32 = arith.constant 0 : i32
    %c0_i32_0 = arith.constant 0 : i32
    %c0_i32_1 = arith.constant 0 : i32
    return %c0_i32, %c0_i32_0 : i32, i32
  }
  func.func @transform_5(%arg0: i32) -> (i32, i32) {
    %c0_i32 = arith.constant 0 : i32
    %c0_i32_0 = arith.constant 0 : i32
    return %arg0, %c0_i32 : i32, i32
  }
}

module attributes {stable_mosaic.version = 11 : i64} {
  func.func @_verb_given_obj_app_kernel(%arg0: i32, %arg1: memref<32x128xbf16, #tpu.memory_space<vmem>>, %arg2: memref<128x256xbf16, #tpu.memory_space<vmem>>, %arg3: memref<1x256xf32, #tpu.memory_space<vmem>>, %arg4: memref<256x128xbf16, #tpu.memory_space<vmem>>, %arg5: memref<1x128xf32, #tpu.memory_space<vmem>>, %arg6: memref<32x128xf32, #tpu.memory_space<vmem>>) attributes {dimension_semantics = [#tpu.dimension_semantics<parallel>], iteration_bounds = array<i64: 2>, scalar_prefetch = 0 : i64, scratch_operands = 0 : i64, tpu.core_type = #tpu.core_type<tc>, window_params = [{transform_indices = @transform_0, window_bounds = array<i64: 32, 128>}, {pipeline_mode = #tpu.pipeline_mode<synchronous>, transform_indices = @transform_1, window_bounds = array<i64: 128, 256>}, {pipeline_mode = #tpu.pipeline_mode<synchronous>, transform_indices = @transform_2, window_bounds = array<i64: 1, 256>}, {pipeline_mode = #tpu.pipeline_mode<synchronous>, transform_indices = @transform_3, window_bounds = array<i64: 256, 128>}, {pipeline_mode = #tpu.pipeline_mode<synchronous>, transform_indices = @transform_4, window_bounds = array<i64: 1, 128>}, {transform_indices = @transform_5, window_bounds = array<i64: 32, 128>}]} {
    %c0 = arith.constant 0 : index
    %c0_0 = arith.constant 0 : index
    %0 = vector.load %arg1[%c0, %c0_0] : memref<32x128xbf16, #tpu.memory_space<vmem>>, vector<32x128xbf16>
    %cst = arith.constant 0.000000e+00 : bf16
    %1 = vector.broadcast %cst : bf16 to vector<32x128xbf16>
    %2 = arith.cmpf one, %0, %1 : vector<32x128xbf16>
    %cst_1 = arith.constant 1.000000e+00 : f32
    %cst_2 = arith.constant 0.000000e+00 : f32
    %3 = vector.broadcast %cst_1 : f32 to vector<32x128xf32>
    %4 = vector.broadcast %cst_2 : f32 to vector<32x128xf32>
    %5 = arith.select %2, %3, %4 : vector<32x128xi1>, vector<32x128xf32>
    %cst_3 = arith.constant dense<0xFF800000> : vector<32xf32>
    %6 = vector.multi_reduction <maximumf>, %5, %cst_3 [1] : vector<32x128xf32> to vector<32xf32>
    %cst_4 = arith.constant 0.000000e+00 : f32
    %7 = vector.broadcast %cst_4 : f32 to vector<32xf32>
    %8 = arith.cmpf ogt, %6, %7 : vector<32xf32>
    %9 = vector.shape_cast %8 : vector<32xi1> to vector<32x1xi1>
    %c0_5 = arith.constant 0 : index
    %c0_6 = arith.constant 0 : index
    %10 = vector.load %arg2[%c0_5, %c0_6] : memref<128x256xbf16, #tpu.memory_space<vmem>>, vector<128x256xbf16>
    %cst_7 = arith.constant dense<0.000000e+00> : vector<32x256xf32>
    %11 = tpu.matmul %0, %10, %cst_7 {dimension_numbers = #tpu.dot_dimension_numbers<[1], [0], [0], [1], [0, 0, 1, 1], [], []>} : vector<32x128xbf16>, vector<128x256xbf16>, vector<32x256xf32> -> vector<32x256xf32>
    %c0_8 = arith.constant 0 : index
    %c0_9 = arith.constant 0 : index
    %12 = vector.load %arg3[%c0_8, %c0_9] : memref<1x256xf32, #tpu.memory_space<vmem>>, vector<1x256xf32>
    %13 = vector.broadcast %12 : vector<1x256xf32> to vector<32x256xf32>
    %14 = arith.addf %11, %13 : vector<32x256xf32>
    %cst_10 = arith.constant 0.000000e+00 : f32
    %15 = vector.broadcast %cst_10 : f32 to vector<32x256xf32>
    %16 = arith.maximumf %14, %15 : vector<32x256xf32>
    %17 = arith.truncf %16 : vector<32x256xf32> to vector<32x256xbf16>
    %c0_11 = arith.constant 0 : index
    %c0_12 = arith.constant 0 : index
    %18 = vector.load %arg4[%c0_11, %c0_12] : memref<256x128xbf16, #tpu.memory_space<vmem>>, vector<256x128xbf16>
    %cst_13 = arith.constant dense<0.000000e+00> : vector<32x128xf32>
    %19 = tpu.matmul %17, %18, %cst_13 {dimension_numbers = #tpu.dot_dimension_numbers<[1], [0], [0], [1], [0, 0, 1, 1], [], []>} : vector<32x256xbf16>, vector<256x128xbf16>, vector<32x128xf32> -> vector<32x128xf32>
    %c0_14 = arith.constant 0 : index
    %c0_15 = arith.constant 0 : index
    %20 = vector.load %arg5[%c0_14, %c0_15] : memref<1x128xf32, #tpu.memory_space<vmem>>, vector<1x128xf32>
    %21 = vector.broadcast %20 : vector<1x128xf32> to vector<32x128xf32>
    %22 = arith.addf %19, %21 : vector<32x128xf32>
    %cst_16 = arith.constant 0.000000e+00 : f32
    %23 = vector.shape_cast %9 : vector<32x1xi1> to vector<32x1xi1>
    %24 = vector.broadcast %23 : vector<32x1xi1> to vector<32x128xi1>
    %25 = vector.broadcast %cst_16 : f32 to vector<32x128xf32>
    %26 = arith.select %24, %22, %25 : vector<32x128xi1>, vector<32x128xf32>
    %c0_17 = arith.constant 0 : index
    %c0_18 = arith.constant 0 : index
    %27 = vector.load %arg6[%c0_17, %c0_18] : memref<32x128xf32, #tpu.memory_space<vmem>>, vector<32x128xf32>
    tpu.vector_store %arg6[%c0_17, %c0_18], %26 {strides = array<i32>} : memref<32x128xf32, #tpu.memory_space<vmem>>, vector<32x128xf32>,
    return
  }
  func.func @transform_0(%arg0: i32) -> (i32, i32) {
    %c0_i32 = arith.constant 0 : i32
    %c0_i32_0 = arith.constant 0 : i32
    return %arg0, %c0_i32 : i32, i32
  }
  func.func @transform_1(%arg0: i32) -> (i32, i32) {
    %c0_i32 = arith.constant 0 : i32
    %c0_i32_0 = arith.constant 0 : i32
    %c0_i32_1 = arith.constant 0 : i32
    return %c0_i32, %c0_i32_0 : i32, i32
  }
  func.func @transform_2(%arg0: i32) -> (i32, i32) {
    %c0_i32 = arith.constant 0 : i32
    %c0_i32_0 = arith.constant 0 : i32
    %c0_i32_1 = arith.constant 0 : i32
    return %c0_i32, %c0_i32_0 : i32, i32
  }
  func.func @transform_3(%arg0: i32) -> (i32, i32) {
    %c0_i32 = arith.constant 0 : i32
    %c0_i32_0 = arith.constant 0 : i32
    %c0_i32_1 = arith.constant 0 : i32
    return %c0_i32, %c0_i32_0 : i32, i32
  }
  func.func @transform_4(%arg0: i32) -> (i32, i32) {
    %c0_i32 = arith.constant 0 : i32
    %c0_i32_0 = arith.constant 0 : i32
    %c0_i32_1 = arith.constant 0 : i32
    return %c0_i32, %c0_i32_0 : i32, i32
  }
  func.func @transform_5(%arg0: i32) -> (i32, i32) {
    %c0_i32 = arith.constant 0 : i32
    %c0_i32_0 = arith.constant 0 : i32
    return %arg0, %c0_i32 : i32, i32
  }
}

</mosaic_0001>

<llo_original>
// kernel: tpu_custom_call.1
$region0: #{tpu_custom_call.1}
  #allocation0 [shape = 'u32[]', space=smem, size = 0x4, offset = 0x4, fixed_abs, tag = 'smem constant byte address 0x4 - core index']
  #allocation1 [shape = 'u32[72,128]{1,0:T(1,128)}', space=vmem, size = 0x9000, scoped, tag = 'internal scratch']
  %s0 = inlined_call_operand.hbm [shape: bf16[48,128], index: 0, kind: input, shape index: {}]
  %s1 = inlined_call_operand.hbm [shape: bf16[128,256], index: 1, kind: input, shape index: {}]
  %s2 = inlined_call_operand.hbm [shape: f32[1,256], index: 2, kind: input, shape index: {}]
  %s3 = inlined_call_operand.hbm [shape: bf16[256,128], index: 3, kind: input, shape index: {}]
  %s4 = inlined_call_operand.vmem [shape: f32[1,128], index: 4, kind: input, shape index: {}]
  %s5 = inlined_call_operand.hbm [shape: f32[48,128], index: 5, kind: output, shape index: {}]
  %s6 = sld [smem:[#allocation0]]
  $region69: #{tpu_custom_call.1} parent=0
    _
  %s8 = ssub.s32 1, %s6
  %s9 = scalar_select 0, %s8, %s6
  $region1: #{tpu_custom_call.1} parent=0
    #allocation2 [shape = 'u8[16384]{0}', space=vmem, size = 0x4000, scoped, tag = 'input window, operand 0']
    #allocation3 [shape = 's32[2]{0}', space=sflag, size = 0x8, scoped, tag = 'scoped memory for tpu_custom_call.1']
    #allocation4 [shape = 's32[2]{0}', space=sflag, size = 0x8, scoped, tag = 'scoped memory for tpu_custom_call.1']
    #allocation5 [shape = 'u8[65536]{0}', space=vmem, size = 0x10000, scoped, tag = 'input window, operand 1, single buffered']
    #allocation6 [shape = 's32[1]{0}', space=sflag, size = 0x4, scoped, tag = 'scoped memory for tpu_custom_call.1']
    #allocation7 [shape = 'u8[1024]{0}', space=vmem, size = 0x400, scoped, tag = 'input window, operand 2, single buffered']
    #allocation8 [shape = 'u8[65536]{0}', space=vmem, size = 0x10000, scoped, tag = 'input window, operand 3, single buffered']
    #allocation9 [shape = 's32[1]{0}', space=sflag, size = 0x4, scoped, tag = 'scoped memory for tpu_custom_call.1']
    #allocation10 [shape = 'u8[32768]{0}', space=vmem, size = 0x8000, scoped, tag = 'output window, operand 0']
    %10 = vsyncpa [#allocation3], 0
    %s11 = scalar_lea.sflag [#allocation3], 1
    %12 = vsyncpa %s11, 0
    %13 = vsyncpa [#allocation6], 0
    %14 = vsyncpa [#allocation9], 0
    %15 = vsyncpa [#allocation4], 0
    %s16 = scalar_lea.sflag [#allocation4], 1
    %17 = vsyncpa %s16, 0
    loop: start=0, step=1, limit=4
    $region2: #{tpu_custom_call.1} parent=1 // loop_pre_header
      _
    $region3: #{tpu_custom_call.1} parent=1 // loop_header
      %s19 = sphi 0, %s23
      %p20 = scmp.ge.s32.totalorder %s19, 4
      %s29 = sphi 0, %s31
      %s32 = sphi 0, %s29
      %s33 = sphi 0, %s32
      %s49 = sphi 0, %s33
      %s53 = sphi 0, %s53
      %s55 = sphi 0, %s53
      %s56 = sphi 0, %s55
      %s70 = sphi 0, %s56
      %s74 = sphi 0, %s74
      %s76 = sphi 0, %s74
      %s77 = sphi 0, %s76
      %s91 = sphi 0, %s77
      %s95 = sphi 0, %s95
      %s97 = sphi 0, %s95
      %s98 = sphi 0, %s97
      %s112 = sphi 0, %s98
      %s116 = sphi 0, %s116
      %s118 = sphi 0, %s116
      %s119 = sphi 0, %s118
      %s133 = sphi 0, %s119
      %s139 = sphi 0, %s141
      %s142 = sphi 0, %s139
      %s143 = sphi 0, %s142
      %s159 = sphi 0, %s143
    $region4: #{tpu_custom_call.1} parent=1 // loop_header_branch
      %22 = sbr.rel (%p20) target = $region8
    $region5: #{tpu_custom_call.1} parent=1 // loop_body
      %s24 = ssub.s32 %s19, 1
      %s25 = ssub.s32 %s19, 2
      %s26 = sadd.s32 %s19, 1
      %s27 = ssub.s32 %s19, %s26
      %p28 = scmp.eq.s32.totalorder %s27, 0
      %s30 = sadd.s32 %s29, 1
      %s31 = scalar_select %p28, %s29, %s30
      %p34 = pneg %p28
      %p35 = scmp.eq.s32.totalorder %s19, 1
      %p36 = por %p34, %p35
      %p37 = scmp.ne.s32.totalorder %s29, %s32
      %p38 = scmp.eq.s32.totalorder %s19, 0
      %p39 = por %p37, %p38
      %p40 = scmp.ne.s32.totalorder %s29, %s32
      %p41 = scmp.eq.s32.totalorder %s24, 1
      %p42 = por %p40, %p41
      %p43 = scmp.ne.s32.totalorder %s32, %s33
      %p44 = scmp.eq.s32.totalorder %s24, 0
      %p45 = por %p43, %p44
      %p46 = scmp.ne.s32.totalorder %s32, %s33
      %p47 = scmp.eq.s32.totalorder %s25, 1
      %p48 = por %p46, %p47
      %p50 = scmp.ne.s32.totalorder %s33, %s49
      %p51 = scmp.eq.s32.totalorder %s25, 0
      %p52 = por %p50, %p51
      %s54 = sadd.s32 %s53, 1
      %p57 = scmp.eq.s32.totalorder %s19, 1
      %p58 = scmp.ne.s32.totalorder %s53, %s55
      %p59 = scmp.eq.s32.totalorder %s19, 0
      %p60 = por %p58, %p59
      %p61 = scmp.ne.s32.totalorder %s53, %s55
      %p62 = scmp.eq.s32.totalorder %s24, 1
      %p63 = por %p61, %p62
      %p64 = scmp.ne.s32.totalorder %s55, %s56
      %p65 = scmp.eq.s32.totalorder %s24, 0
      %p66 = por %p64, %p65
      %p67 = scmp.ne.s32.totalorder %s55, %s56
      %p68 = scmp.eq.s32.totalorder %s25, 1
      %p69 = por %p67, %p68
      %p71 = scmp.ne.s32.totalorder %s56, %s70
      %p72 = scmp.eq.s32.totalorder %s25, 0
      %p73 = por %p71, %p72
      %s75 = sadd.s32 %s74, 1
      %p78 = scmp.eq.s32.totalorder %s19, 1
      %p79 = scmp.ne.s32.totalorder %s74, %s76
      %p80 = scmp.eq.s32.totalorder %s19, 0
      %p81 = por %p79, %p80
      %p82 = scmp.ne.s32.totalorder %s74, %s76
      %p83 = scmp.eq.s32.totalorder %s24, 1
      %p84 = por %p82, %p83
      %p85 = scmp.ne.s32.totalorder %s76, %s77
      %p86 = scmp.eq.s32.totalorder %s24, 0
      %p87 = por %p85, %p86
      %p88 = scmp.ne.s32.totalorder %s76, %s77
      %p89 = scmp.eq.s32.totalorder %s25, 1
      %p90 = por %p88, %p89
      %p92 = scmp.ne.s32.totalorder %s77, %s91
      %p93 = scmp.eq.s32.totalorder %s25, 0
      %p94 = por %p92, %p93
      %s96 = sadd.s32 %s95, 1
      %p99 = scmp.eq.s32.totalorder %s19, 1
      %p100 = scmp.ne.s32.totalorder %s95, %s97
      %p101 = scmp.eq.s32.totalorder %s19, 0
      %p102 = por %p100, %p101
      %p103 = scmp.ne.s32.totalorder %s95, %s97
      %p104 = scmp.eq.s32.totalorder %s24, 1
      %p105 = por %p103, %p104
      %p106 = scmp.ne.s32.totalorder %s97, %s98
      %p107 = scmp.eq.s32.totalorder %s24, 0
      %p108 = por %p106, %p107
      %p109 = scmp.ne.s32.totalorder %s97, %s98
      %p110 = scmp.eq.s32.totalorder %s25, 1
      %p111 = por %p109, %p110
      %p113 = scmp.ne.s32.totalorder %s98, %s112
      %p114 = scmp.eq.s32.totalorder %s25, 0
      %p115 = por %p113, %p114
      %s117 = sadd.s32 %s116, 1
      %p120 = scmp.eq.s32.totalorder %s19, 1
      %p121 = scmp.ne.s32.totalorder %s116, %s118
      %p122 = scmp.eq.s32.totalorder %s19, 0
      %p123 = por %p121, %p122
      %p124 = scmp.ne.s32.totalorder %s116, %s118
      %p125 = scmp.eq.s32.totalorder %s24, 1
      %p126 = por %p124, %p125
      %p127 = scmp.ne.s32.totalorder %s118, %s119
      %p128 = scmp.eq.s32.totalorder %s24, 0
      %p129 = por %p127, %p128
      %p130 = scmp.ne.s32.totalorder %s118, %s119
      %p131 = scmp.eq.s32.totalorder %s25, 1
      %p132 = por %p130, %p131
      %p134 = scmp.ne.s32.totalorder %s119, %s133
      %p135 = scmp.eq.s32.totalorder %s25, 0
      %p136 = por %p134, %p135
      %s137 = ssub.s32 %s19, %s26
      %p138 = scmp.eq.s32.totalorder %s137, 0
      %s140 = sadd.s32 %s139, 1
      %s141 = scalar_select %p138, %s139, %s140
      %p144 = pneg %p138
      %p145 = scmp.eq.s32.totalorder %s19, 1
      %p146 = por %p144, %p145
      %p147 = scmp.ne.s32.totalorder %s139, %s142
      %p148 = scmp.eq.s32.totalorder %s19, 0
      %p149 = por %p147, %p148
      %p150 = scmp.ne.s32.totalorder %s139, %s142
      %p151 = scmp.eq.s32.totalorder %s24, 1
      %p152 = por %p150, %p151
      %p153 = scmp.ne.s32.totalorder %s142, %s143
      %p154 = scmp.eq.s32.totalorder %s24, 0
      %p155 = por %p153, %p154
      %p156 = scmp.ne.s32.totalorder %s142, %s143
      %p157 = scmp.eq.s32.totalorder %s25, 1
      %p158 = por %p156, %p157
      %p160 = scmp.ne.s32.totalorder %s143, %s159
      %p161 = scmp.eq.s32.totalorder %s25, 0
      %p162 = por %p160, %p161
      %p163 = scmp.le.s32.totalorder 1, %s19
      %p164 = scmp.lt.s32.totalorder %s19, 3
      %p165 = pnand %p163, %p164
      %p166 = pneg %p165
      // Predicated region
      $region9: #{tpu_custom_call.1} parent=5 // pred_check
        _
      $region10: #{tpu_custom_call.1} parent=5 // pred_check_branch
        %168 = sbr.rel (%p165) target = $region12
      $region11: #{tpu_custom_call.1} parent=5 // pred_region
        %s169 = ssub.s32 %s19, 1
        // Predicated region
        $region13: #{tpu_custom_call.1} parent=11 // pred_check
          %p170 = pneg %p66
        $region14: #{tpu_custom_call.1} parent=11 // pred_check_branch
          %172 = sbr.rel (%p170) target = $region16
        $region15: #{tpu_custom_call.1} parent=11 // pred_region
          %174 = vsyncadd [#allocation6], 0
          %s175 = sshll.u32 %s1, 4
          %s176 = int_to_ptr.hbm [resolvable:$true] %s175
          %s177 = sshll.u32 [#allocation5], 4
          %s178 = int_to_ptr.vmem [resolvable:$true] %s177
          %183 = dma.hbm_to_vmem [thread:$0]  %s176, 2048, %s178, [#allocation6], 128, 128, 8
        $region16: #{tpu_custom_call.1} parent=11 // pred_fallthru
          _
        // Predicated region
        $region17: #{tpu_custom_call.1} parent=11 // pred_check
          %p184 = pneg %p87
        $region18: #{tpu_custom_call.1} parent=11 // pred_check_branch
          %186 = sbr.rel (%p184) target = $region20
        $region19: #{tpu_custom_call.1} parent=11 // pred_region
          %188 = vsyncadd [#allocation6], 0
          %s190 = sshll.u32 %s2, 4
          %s191 = int_to_ptr.hbm [resolvable:$true] %s190
          %s192 = sshll.u32 [#allocation7], 4
          %s193 = int_to_ptr.vmem [resolvable:$true] %s192
          %195 = dma.hbm_to_vmem [thread:$0]  %s191, 32, %s193, [#allocation6]
        $region20: #{tpu_custom_call.1} parent=11 // pred_fallthru
          _
        // Predicated region
        $region21: #{tpu_custom_call.1} parent=11 // pred_check
          %p196 = pneg %p108
        $region22: #{tpu_custom_call.1} parent=11 // pred_check_branch
          %198 = sbr.rel (%p196) target = $region24
        $region23: #{tpu_custom_call.1} parent=11 // pred_region
          %200 = vsyncadd [#allocation9], 0
          %s201 = sshll.u32 %s3, 4
          %s202 = int_to_ptr.hbm [resolvable:$true] %s201
          %s203 = sshll.u32 [#allocation8], 4
          %s204 = int_to_ptr.vmem [resolvable:$true] %s203
          %209 = dma.hbm_to_vmem [thread:$0]  %s202, 2048, %s204, [#allocation9], 64, 64, 4
        $region24: #{tpu_custom_call.1} parent=11 // pred_fallthru
          _
        // Predicated region
        $region25: #{tpu_custom_call.1} parent=11 // pred_check
          %p210 = pneg %p129
        $region26: #{tpu_custom_call.1} parent=11 // pred_check_branch
          %212 = sbr.rel (%p210) target = $region28
        $region27: #{tpu_custom_call.1} parent=11 // pred_region
          _
        $region28: #{tpu_custom_call.1} parent=11 // pred_fallthru
          _
      $region12: #{tpu_custom_call.1} parent=5 // pred_fallthru
        _
      %p213 = scmp.lt.s32.totalorder %s19, 2
      // Predicated region
      $region29: #{tpu_custom_call.1} parent=5 // pred_check
        %p214 = pneg %p213
      $region30: #{tpu_custom_call.1} parent=5 // pred_check_branch
        %216 = sbr.rel (%p214) target = $region32
      $region31: #{tpu_custom_call.1} parent=5 // pred_region
        // Predicated region
        $region33: #{tpu_custom_call.1} parent=31 // pred_check
          %p217 = pneg %p39
        $region34: #{tpu_custom_call.1} parent=31 // pred_check_branch
          %219 = sbr.rel (%p217) target = $region36
        $region35: #{tpu_custom_call.1} parent=31 // pred_region
          %s220 = sand.u32 %s29, 1
          %s221 = scalar_lea.sflag [#allocation3], %s220
          %s222 = sand.u32 %s29, 1
          %s223 = smul.addr %s222, 16
          %s224 = scalar_lea.vmem [#allocation2], %s223
          %s225 = smul.u32 4, %s19
          %s226 = ssub.s32 6, %s225
          %p227 = scmp.lt.s32.totalorder %s226, 4
          %s228 = scalar_select %p227, %s226, 4
          %s229 = smul.u32 4, %s228
          %s230 = ssub.s32 16, %s229
          %s231 = sshll.u32 %s230, 4
          %232 = vsyncadd %s221, %s231
          %p233 = scmp.ne.s32.totalorder 0, %s229
          %s234 = smul.addr %s225, 4
          %s235 = scalar_lea.hbm %s0, %s234
          %s236 = smul.u32 4, %s228
          %s237 = sshll.u32 %s235, 4
          %s238 = int_to_ptr.hbm [resolvable:$true] %s237
          %s239 = sshll.u32 %s224, 4
          %s240 = int_to_ptr.vmem [resolvable:$true] %s239
          %s241 = sshll.u32 %s236, 4
          %245 = dma.hbm_to_vmem [thread:$0]  (%p233), %s238, %s241, %s240, %s221, 64, 64, 4
        $region36: #{tpu_custom_call.1} parent=31 // pred_fallthru
          _
      $region32: #{tpu_custom_call.1} parent=5 // pred_fallthru
        _
      %p246 = scmp.le.s32.totalorder 1, %s19
      %p247 = scmp.lt.s32.totalorder %s19, 3
      %p248 = pnand %p246, %p247
      %p249 = pneg %p248
      // Predicated region
      $region37: #{tpu_custom_call.1} parent=5 // pred_check
        _
      $region38: #{tpu_custom_call.1} parent=5 // pred_check_branch
        %251 = sbr.rel (%p248) target = $region40
      $region39: #{tpu_custom_call.1} parent=5 // pred_region
        %s252 = ssub.s32 %s19, 1
        %s253 = sand.u32 %s32, 1
        %s254 = scalar_lea.sflag [#allocation3], %s253
        %s255 = sand.u32 %s32, 1
        %s256 = smul.addr %s255, 16
        %s257 = scalar_lea.vmem [#allocation2], %s256
        // Predicated region
        $region41: #{tpu_custom_call.1} parent=39 // pred_check
          %p258 = pneg %p45
        $region42: #{tpu_custom_call.1} parent=39 // pred_check_branch
          %260 = sbr.rel (%p258) target = $region44
        $region43: #{tpu_custom_call.1} parent=39 // pred_region
          %262 = dma.done %s254, 256
        $region44: #{tpu_custom_call.1} parent=39 // pred_fallthru
          _
        // Predicated region
        $region45: #{tpu_custom_call.1} parent=39 // pred_check
          %p263 = pneg %p66
        $region46: #{tpu_custom_call.1} parent=39 // pred_check_branch
          %265 = sbr.rel (%p263) target = $region48
        $region47: #{tpu_custom_call.1} parent=39 // pred_region
          %267 = dma.done [#allocation6], 2048
        $region48: #{tpu_custom_call.1} parent=39 // pred_fallthru
          _
        // Predicated region
        $region49: #{tpu_custom_call.1} parent=39 // pred_check
          %p268 = pneg %p87
        $region50: #{tpu_custom_call.1} parent=39 // pred_check_branch
          %270 = sbr.rel (%p268) target = $region52
        $region51: #{tpu_custom_call.1} parent=39 // pred_region
          %272 = dma.done [#allocation6], 32
        $region52: #{tpu_custom_call.1} parent=39 // pred_fallthru
          _
        // Predicated region
        $region53: #{tpu_custom_call.1} parent=39 // pred_check
          %p273 = pneg %p108
        $region54: #{tpu_custom_call.1} parent=39 // pred_check_branch
          %275 = sbr.rel (%p273) target = $region56
        $region55: #{tpu_custom_call.1} parent=39 // pred_region
          %277 = dma.done [#allocation9], 2048
        $region56: #{tpu_custom_call.1} parent=39 // pred_fallthru
          _
        %s278 = sand.u32 %s32, 1
        %s279 = scalar_lea.sflag [#allocation3], %s278
        %s280 = sand.u32 %s32, 1
        %s281 = smul.addr %s280, 16
        %s282 = scalar_lea.vmem [#allocation2], %s281
        %p283 = pneg %p45
        %p284 = pneg %p42
        %p285 = pneg %p66
        %p286 = pneg %p63
        %p287 = pneg %p87
        %p288 = pneg %p84
        %p289 = pneg %p108
        %p290 = pneg %p105
        %p291 = pneg %p129
        %p292 = pneg %p126
        %p293 = pneg %p155
        %p294 = pneg %p152
        %s295 = sand.u32 %s142, 1
        %s296 = scalar_lea.sflag [#allocation4], %s295
        %s297 = sand.u32 %s142, 1
        %s298 = smul.addr %s297, 32
        %s299 = scalar_lea.vmem [#allocation10], %s298
        %s300 = smul.u32 4, %s24
        %s301 = ssub.s32 6, %s300
        %p302 = scmp.lt.s32.totalorder %s301, 4
        %s303 = scalar_select %p302, %s301, 4
        %s304 = smul.u32 4, %s303
        %s305 = smul.u32 4, %s24
        %s306 = ssub.s32 6, %s305
        %p307 = scmp.lt.s32.totalorder %s306, 4
        %s308 = scalar_select %p307, %s306, 4
        %s309 = smul.u32 8, %s308
        %v310 = vld [vmem:[%s257] sm:$0xf]
        %v311 = vld [vmem:[%s257 + $0x4] sm:$0xf]
        %v312 = vld [vmem:[%s257 + $0x8] sm:$0xf]
        %v313 = vld [vmem:[%s257 + $0xc] sm:$0xf]
        %v314 = vunpack.c.l.bf16 %v310
        %v315 = vunpack.c.l.bf16 %v311
        %v316 = vunpack.c.l.bf16 %v312
        %v317 = vunpack.c.l.bf16 %v313
        %vm318 = vcmp.ne.f32.partialorder %v314, 0.0
        %vm319 = vcmp.ne.f32.partialorder %v315, 0.0
        %vm320 = vcmp.ne.f32.partialorder %v316, 0.0
        %vm321 = vcmp.ne.f32.partialorder %v317, 0.0
        %v322 = vsel %vm318, 1.0, 0.0
        %v323 = vsel %vm319, 1.0, 0.0
        %v324 = vsel %vm320, 1.0, 0.0
        %v325 = vsel %vm321, 1.0, 0.0
        %326 = vmax.xlane.f32.xlu0 %v322
        %v327 = vpop.xlane.xlu0 %326
        %328 = vmax.xlane.f32.xlu0 %v323
        %v329 = vpop.xlane.xlu0 %328
        %330 = vmax.xlane.f32.xlu0 %v324
        %v331 = vpop.xlane.xlu0 %330
        %332 = vmax.xlane.f32.xlu0 %v325
        %v333 = vpop.xlane.xlu0 %332
        %vm334 = vcmp.gt.f32.partialorder %v327, 0.0
        %vm335 = vcmp.gt.f32.partialorder %v329, 0.0
        %vm336 = vcmp.gt.f32.partialorder %v331, 0.0
        %vm337 = vcmp.gt.f32.partialorder %v333, 0.0
        %v338 = vld [vmem:[#allocation5] sm:$0xff]
        %v339 = vld [vmem:[#allocation5 + $0x8] sm:$0xff]
        %v340 = vld [vmem:[#allocation5 + $0x10] sm:$0xff]
        %v341 = vld [vmem:[#allocation5 + $0x18] sm:$0xff]
        %v342 = vld [vmem:[#allocation5 + $0x20] sm:$0xff]
        %v343 = vld [vmem:[#allocation5 + $0x28] sm:$0xff]
        %v344 = vld [vmem:[#allocation5 + $0x30] sm:$0xff]
        %v345 = vld [vmem:[#allocation5 + $0x38] sm:$0xff]
        %v346 = vld [vmem:[#allocation5 + $0x40] sm:$0xff]
        %v347 = vld [vmem:[#allocation5 + $0x48] sm:$0xff]
        %v348 = vld [vmem:[#allocation5 + $0x50] sm:$0xff]
        %v349 = vld [vmem:[#allocation5 + $0x58] sm:$0xff]
        %v350 = vld [vmem:[#allocation5 + $0x60] sm:$0xff]
        %v351 = vld [vmem:[#allocation5 + $0x68] sm:$0xff]
        %v352 = vld [vmem:[#allocation5 + $0x70] sm:$0xff]
        %v353 = vld [vmem:[#allocation5 + $0x78] sm:$0xff]
        %v354 = vld [vmem:[#allocation7] sm:$0x3]
        %v356 = vperm.slane %v354, 0
        %v357 = vperm.slane %v354, 1
        %v364 = vunpack.c.l.b16 %v310
        %v365 = vunpack.c.l.b16 %v311
        %v366 = vunpack.c.l.b16 %v312
        %v367 = vunpack.c.l.b16 %v313
        %v368 = vpack.c.b16 %v365, %v364
        %v369 = vpack.c.b16 %v367, %v366
        %v388 = vunpack.c.l.b16 %v338
        %v389 = vunpack.c.h.b16 %v338
        %v390 = vunpack.c.l.b16 %v339
        %v391 = vunpack.c.h.b16 %v339
        %v392 = vunpack.c.l.b16 %v340
        %v393 = vunpack.c.h.b16 %v340
        %v394 = vunpack.c.l.b16 %v341
        %v395 = vunpack.c.h.b16 %v341
        %v396 = vunpack.c.l.b16 %v342
        %v397 = vunpack.c.h.b16 %v342
        %v398 = vunpack.c.l.b16 %v343
        %v399 = vunpack.c.h.b16 %v343
        %v400 = vunpack.c.l.b16 %v344
        %v401 = vunpack.c.h.b16 %v344
        %v402 = vunpack.c.l.b16 %v345
        %v403 = vunpack.c.h.b16 %v345
        %v404 = vunpack.c.l.b16 %v346
        %v405 = vunpack.c.h.b16 %v346
        %v406 = vunpack.c.l.b16 %v347
        %v407 = vunpack.c.h.b16 %v347
        %v408 = vunpack.c.l.b16 %v348
        %v409 = vunpack.c.h.b16 %v348
        %v410 = vunpack.c.l.b16 %v349
        %v411 = vunpack.c.h.b16 %v349
        %v412 = vunpack.c.l.b16 %v350
        %v413 = vunpack.c.h.b16 %v350
        %v414 = vunpack.c.l.b16 %v351
        %v415 = vunpack.c.h.b16 %v351
        %v416 = vunpack.c.l.b16 %v352
        %v417 = vunpack.c.h.b16 %v352
        %v418 = vunpack.c.l.b16 %v353
        %v419 = vunpack.c.h.b16 %v353
        %v420 = vpack.c.b16 %v390, %v388
        %v421 = vpack.c.b16 %v391, %v389
        %v422 = vpack.c.b16 %v394, %v392
        %v423 = vpack.c.b16 %v395, %v393
        %v424 = vpack.c.b16 %v398, %v396
        %v425 = vpack.c.b16 %v399, %v397
        %v426 = vpack.c.b16 %v402, %v400
        %v427 = vpack.c.b16 %v403, %v401
        %v428 = vpack.c.b16 %v406, %v404
        %v429 = vpack.c.b16 %v407, %v405
        %v430 = vpack.c.b16 %v410, %v408
        %v431 = vpack.c.b16 %v411, %v409
        %v432 = vpack.c.b16 %v414, %v412
        %v433 = vpack.c.b16 %v415, %v413
        %v434 = vpack.c.b16 %v418, %v416
        %v435 = vpack.c.b16 %v419, %v417
        %452 = vmatpush.bf16.msra.mxu0 %v434
        %453 = vmatpush.bf16.msra.mxu0 %v432
        %454 = vmatpush.bf16.msra.mxu0 %v430
        %455 = vmatpush.bf16.msra.mxu0 %v428
        %456 = vmatpush.bf16.msra.mxu0 %v426
        %457 = vmatpush.bf16.msra.mxu0 %v424
        %458 = vmatpush.bf16.msra.mxu0 %v422
        %459 = vmatpush.bf16.msra.mxu0 %v420
        %460 = vmatmul.bf16.gmra.mxu0 %v368
        %v461 = vpop.f32.mrf.mxu0
        %v462 = vadd.f32 %v356, %v461
        %v463 = vpop.f32.mrf.mxu0
        %v464 = vadd.f32 %v356, %v463
        %465 = vmatmul.bf16.gmra.mxu0 %v369
        %v466 = vpop.f32.mrf.mxu0
        %v467 = vadd.f32 %v356, %v466
        %v468 = vpop.f32.mrf.mxu0
        %v469 = vadd.f32 %v356, %v468
        %470 = vdwg.mxu0
        %471 = vmatpush.bf16.msra.mxu0 %v435
        %472 = vmatpush.bf16.msra.mxu0 %v433
        %473 = vmatpush.bf16.msra.mxu0 %v431
        %474 = vmatpush.bf16.msra.mxu0 %v429
        %475 = vmatpush.bf16.msra.mxu0 %v427
        %476 = vmatpush.bf16.msra.mxu0 %v425
        %477 = vmatpush.bf16.msra.mxu0 %v423
        %478 = vmatpush.bf16.msra.mxu0 %v421
        %479 = vmatmul.bf16.gmra.mxu0 %v368
        %v480 = vpop.f32.mrf.mxu0
        %v481 = vadd.f32 %v357, %v480
        %v482 = vpop.f32.mrf.mxu0
        %v483 = vadd.f32 %v357, %v482
        %484 = vmatmul.bf16.gmra.mxu0 %v369
        %v485 = vpop.f32.mrf.mxu0
        %v486 = vadd.f32 %v357, %v485
        %v487 = vpop.f32.mrf.mxu0
        %v488 = vadd.f32 %v357, %v487
        %489 = vdwg.mxu0
        %v490 = vmax.f32 %v462, 0.0
        %v491 = vmax.f32 %v481, 0.0
        %v492 = vmax.f32 %v464, 0.0
        %v493 = vmax.f32 %v483, 0.0
        %v494 = vmax.f32 %v467, 0.0
        %v495 = vmax.f32 %v486, 0.0
        %v496 = vmax.f32 %v469, 0.0
        %v497 = vmax.f32 %v488, 0.0
        %v498 = vpack.c.bf16 %v492, %v490
        %v499 = vpack.c.bf16 %v493, %v491
        %v500 = vpack.c.bf16 %v496, %v494
        %v501 = vpack.c.bf16 %v497, %v495
        %v502 = vld [vmem:[#allocation8] sm:$0xf]
        %v503 = vld [vmem:[#allocation8 + $0x4] sm:$0xf]
        %v504 = vld [vmem:[#allocation8 + $0x8] sm:$0xf]
        %v505 = vld [vmem:[#allocation8 + $0xc] sm:$0xf]
        %v506 = vld [vmem:[#allocation8 + $0x10] sm:$0xf]
        %v507 = vld [vmem:[#allocation8 + $0x14] sm:$0xf]
        %v508 = vld [vmem:[#allocation8 + $0x18] sm:$0xf]
        %v509 = vld [vmem:[#allocation8 + $0x1c] sm:$0xf]
        %v510 = vld [vmem:[#allocation8 + $0x20] sm:$0xf]
        %v511 = vld [vmem:[#allocation8 + $0x24] sm:$0xf]
        %v512 = vld [vmem:[#allocation8 + $0x28] sm:$0xf]
        %v513 = vld [vmem:[#allocation8 + $0x2c] sm:$0xf]
        %v514 = vld [vmem:[#allocation8 + $0x30] sm:$0xf]
        %v515 = vld [vmem:[#allocation8 + $0x34] sm:$0xf]
        %v516 = vld [vmem:[#allocation8 + $0x38] sm:$0xf]
        %v517 = vld [vmem:[#allocation8 + $0x3c] sm:$0xf]
        %v518 = vld [vmem:[#allocation8 + $0x40] sm:$0xf]
        %v519 = vld [vmem:[#allocation8 + $0x44] sm:$0xf]
        %v520 = vld [vmem:[#allocation8 + $0x48] sm:$0xf]
        %v521 = vld [vmem:[#allocation8 + $0x4c] sm:$0xf]
        %v522 = vld [vmem:[#allocation8 + $0x50] sm:$0xf]
        %v523 = vld [vmem:[#allocation8 + $0x54] sm:$0xf]
        %v524 = vld [vmem:[#allocation8 + $0x58] sm:$0xf]
        %v525 = vld [vmem:[#allocation8 + $0x5c] sm:$0xf]
        %v526 = vld [vmem:[#allocation8 + $0x60] sm:$0xf]
        %v527 = vld [vmem:[#allocation8 + $0x64] sm:$0xf]
        %v528 = vld [vmem:[#allocation8 + $0x68] sm:$0xf]
        %v529 = vld [vmem:[#allocation8 + $0x6c] sm:$0xf]
        %v530 = vld [vmem:[#allocation8 + $0x70] sm:$0xf]
        %v531 = vld [vmem:[#allocation8 + $0x74] sm:$0xf]
        %v532 = vld [vmem:[#allocation8 + $0x78] sm:$0xf]
        %v533 = vld [vmem:[#allocation8 + $0x7c] sm:$0xf]
        %v534 = vld [vmem:[%s4] sm:$0x1]
        %v536 = vperm.slane %v534, 0
        %v570 = vunpack.c.l.b16 %v502
        %v571 = vunpack.c.l.b16 %v503
        %v572 = vunpack.c.l.b16 %v504
        %v573 = vunpack.c.l.b16 %v505
        %v574 = vunpack.c.l.b16 %v506
        %v575 = vunpack.c.l.b16 %v507
        %v576 = vunpack.c.l.b16 %v508
        %v577 = vunpack.c.l.b16 %v509
        %v578 = vunpack.c.l.b16 %v510
        %v579 = vunpack.c.l.b16 %v511
        %v580 = vunpack.c.l.b16 %v512
        %v581 = vunpack.c.l.b16 %v513
        %v582 = vunpack.c.l.b16 %v514
        %v583 = vunpack.c.l.b16 %v515
        %v584 = vunpack.c.l.b16 %v516
        %v585 = vunpack.c.l.b16 %v517
        %v586 = vunpack.c.l.b16 %v518
        %v587 = vunpack.c.l.b16 %v519
        %v588 = vunpack.c.l.b16 %v520
        %v589 = vunpack.c.l.b16 %v521
        %v590 = vunpack.c.l.b16 %v522
        %v591 = vunpack.c.l.b16 %v523
        %v592 = vunpack.c.l.b16 %v524
        %v593 = vunpack.c.l.b16 %v525
        %v594 = vunpack.c.l.b16 %v526
        %v595 = vunpack.c.l.b16 %v527
        %v596 = vunpack.c.l.b16 %v528
        %v597 = vunpack.c.l.b16 %v529
        %v598 = vunpack.c.l.b16 %v530
        %v599 = vunpack.c.l.b16 %v531
        %v600 = vunpack.c.l.b16 %v532
        %v601 = vunpack.c.l.b16 %v533
        %v602 = vpack.c.b16 %v571, %v570
        %v603 = vpack.c.b16 %v573, %v572
        %v604 = vpack.c.b16 %v575, %v574
        %v605 = vpack.c.b16 %v577, %v576
        %v606 = vpack.c.b16 %v579, %v578
        %v607 = vpack.c.b16 %v581, %v580
        %v608 = vpack.c.b16 %v583, %v582
        %v609 = vpack.c.b16 %v585, %v584
        %v610 = vpack.c.b16 %v587, %v586
        %v611 = vpack.c.b16 %v589, %v588
        %v612 = vpack.c.b16 %v591, %v590
        %v613 = vpack.c.b16 %v593, %v592
        %v614 = vpack.c.b16 %v595, %v594
        %v615 = vpack.c.b16 %v597, %v596
        %v616 = vpack.c.b16 %v599, %v598
        %v617 = vpack.c.b16 %v601, %v600
        %634 = vmatpush.bf16.msra.mxu0 %v609
        %635 = vmatpush.bf16.msra.mxu0 %v608
        %636 = vmatpush.bf16.msra.mxu0 %v607
        %637 = vmatpush.bf16.msra.mxu0 %v606
        %638 = vmatpush.bf16.msra.mxu0 %v605
        %639 = vmatpush.bf16.msra.mxu0 %v604
        %640 = vmatpush.bf16.msra.mxu0 %v603
        %641 = vmatpush.bf16.msra.mxu0 %v602
        %642 = vmatmul.bf16.gmra.mxu0 %v498
        %v643 = vpop.f32.mrf.mxu0
        %v644 = vadd.f32 %v536, %v643
        %v645 = vpop.f32.mrf.mxu0
        %v646 = vadd.f32 %v536, %v645
        %647 = vmatmul.bf16.gmra.mxu0 %v500
        %v648 = vpop.f32.mrf.mxu0
        %v649 = vadd.f32 %v536, %v648
        %v650 = vpop.f32.mrf.mxu0
        %v651 = vadd.f32 %v536, %v650
        %652 = vdwg.mxu0
        %653 = vmatpush.bf16.msra.mxu0 %v617
        %654 = vmatpush.bf16.msra.mxu0 %v616
        %655 = vmatpush.bf16.msra.mxu0 %v615
        %656 = vmatpush.bf16.msra.mxu0 %v614
        %657 = vmatpush.bf16.msra.mxu0 %v613
        %658 = vmatpush.bf16.msra.mxu0 %v612
        %659 = vmatpush.bf16.msra.mxu0 %v611
        %660 = vmatpush.bf16.msra.mxu0 %v610
        %661 = vmatmul.bf16.gmra.mxu0 %v499
        %v662 = vpop.f32.mrf.mxu0
        %v663 = vadd.f32 %v644, %v662
        %v664 = vpop.f32.mrf.mxu0
        %v665 = vadd.f32 %v646, %v664
        %666 = vmatmul.bf16.gmra.mxu0 %v501
        %v667 = vpop.f32.mrf.mxu0
        %v668 = vadd.f32 %v649, %v667
        %v669 = vpop.f32.mrf.mxu0
        %v670 = vadd.f32 %v651, %v669
        %671 = vdwg.mxu0
        %v672 = vsel %vm334, 1, 0
        %v673 = vsel %vm335, 1, 0
        %v674 = vsel %vm336, 1, 0
        %v675 = vsel %vm337, 1, 0
        %vm676 = vcmp.eq.s32.totalorder %v672, 1
        %vm677 = vcmp.eq.s32.totalorder %v673, 1
        %vm678 = vcmp.eq.s32.totalorder %v674, 1
        %vm679 = vcmp.eq.s32.totalorder %v675, 1
        %v680 = vsel %vm676, %v663, 0.0
        %v681 = vsel %vm677, %v665, 0.0
        %v682 = vsel %vm678, %v668, 0.0
        %v683 = vsel %vm679, %v670, 0.0
        %684 = vst [vmem:[%s299] sm:$0xff] %v680
        %685 = vst [vmem:[%s299 + $0x8] sm:$0xff] %v681
        %686 = vst [vmem:[%s299 + $0x10] sm:$0xff] %v682
        %687 = vst [vmem:[%s299 + $0x18] sm:$0xff] %v683
        %s688 = sand.u32 %s142, 1
        %s689 = scalar_lea.sflag [#allocation4], %s688
        %s690 = sand.u32 %s142, 1
        %s691 = smul.addr %s690, 32
        %s692 = scalar_lea.vmem [#allocation10], %s691
        // Predicated region
        $region57: #{tpu_custom_call.1} parent=39 // pred_check
          %p693 = pneg %p152
        $region58: #{tpu_custom_call.1} parent=39 // pred_check_branch
          %695 = sbr.rel (%p693) target = $region60
        $region59: #{tpu_custom_call.1} parent=39 // pred_region
          %s696 = smul.u32 4, %s24
          %s697 = ssub.s32 6, %s696
          %p698 = scmp.lt.s32.totalorder %s697, 4
          %s699 = scalar_select %p698, %s697, 4
          %s700 = smul.u32 8, %s699
          %s701 = ssub.s32 32, %s700
          %s702 = sshll.u32 %s701, 4
          %703 = vsyncadd %s689, %s702
          %p704 = scmp.ne.s32.totalorder 0, %s700
          %s705 = smul.addr %s696, 8
          %s706 = scalar_lea.hbm %s5, %s705
          %s707 = smul.u32 8, %s699
          %s708 = sshll.u32 %s692, 4
          %s709 = int_to_ptr.vmem [resolvable:$true] %s708
          %s710 = sshll.u32 %s706, 4
          %s711 = int_to_ptr.hbm [resolvable:$true] %s710
          %s712 = sshll.u32 %s707, 4
          %716 = dma.vmem_to_hbm [thread:$0]  (%p704), %s709, %s712, %s711, %s689, 128, 128, 8
        $region60: #{tpu_custom_call.1} parent=39 // pred_fallthru
          _
      $region40: #{tpu_custom_call.1} parent=5 // pred_fallthru
        _
      %p717 = scmp.le.s32.totalorder 2, %s19
      // Predicated region
      $region61: #{tpu_custom_call.1} parent=5 // pred_check
        %p718 = pneg %p717
      $region62: #{tpu_custom_call.1} parent=5 // pred_check_branch
        %720 = sbr.rel (%p718) target = $region64
      $region63: #{tpu_custom_call.1} parent=5 // pred_region
        %s721 = ssub.s32 %s19, 2
        // Predicated region
        $region65: #{tpu_custom_call.1} parent=63 // pred_check
          %p722 = pneg %p158
        $region66: #{tpu_custom_call.1} parent=63 // pred_check_branch
          %724 = sbr.rel (%p722) target = $region68
        $region67: #{tpu_custom_call.1} parent=63 // pred_region
          %s725 = sand.u32 %s143, 1
          %s726 = scalar_lea.sflag [#allocation4], %s725
          %s727 = sand.u32 %s143, 1
          %s728 = smul.addr %s727, 32
          %s729 = scalar_lea.vmem [#allocation10], %s728
          %731 = dma.done %s726, 512
        $region68: #{tpu_custom_call.1} parent=63 // pred_fallthru
          _
      $region64: #{tpu_custom_call.1} parent=5 // pred_fallthru
        _
    $region6: #{tpu_custom_call.1} parent=1 // loop_footer
      %s23 = sadd.s32 1, %s19
    $region7: #{tpu_custom_call.1} parent=1 // loop_footer_branch
      %18 = sbr.rel target = $region3
    $region8: #{tpu_custom_call.1} parent=1 // loop_exit
      _
    %732 = vsyncpa [#allocation3], 1
    %s733 = scalar_lea.sflag [#allocation3], 1
    %734 = vsyncpa %s733, 1
    %735 = vsyncpa [#allocation6], 1
    %736 = vsyncpa [#allocation9], 1
    %737 = vsyncpa [#allocation4], 1
    %s738 = scalar_lea.sflag [#allocation4], 1
    %739 = vsyncpa %s738, 1

// kernel: tpu_custom_call.1
$region0: #{tpu_custom_call.1}
  #allocation0 [shape = 'u32[]', space=smem, size = 0x4, offset = 0x4, fixed_abs, tag = 'smem constant byte address 0x4 - core index']
  #allocation1 [shape = 'u32[72,128]{1,0:T(1,128)}', space=vmem, size = 0x9000, scoped, tag = 'internal scratch']
  %s0 = inlined_call_operand.hbm [shape: bf16[48,128], index: 0, kind: input, shape index: {}]
  %s1 = inlined_call_operand.hbm [shape: bf16[128,256], index: 1, kind: input, shape index: {}]
  %s2 = inlined_call_operand.hbm [shape: f32[1,256], index: 2, kind: input, shape index: {}]
  %s3 = inlined_call_operand.hbm [shape: bf16[256,128], index: 3, kind: input, shape index: {}]
  %s4 = inlined_call_operand.vmem [shape: f32[1,128], index: 4, kind: input, shape index: {}]
  %s5 = inlined_call_operand.hbm [shape: f32[48,128], index: 5, kind: output, shape index: {}]
  %s6 = sld [smem:[#allocation0]]
  $region69: #{tpu_custom_call.1} parent=0
    _
  %s8 = ssub.s32 1, %s6
  %s9 = scalar_select 0, %s8, %s6
  $region1: #{tpu_custom_call.1} parent=0
    #allocation2 [shape = 'u8[16384]{0}', space=vmem, size = 0x4000, scoped, tag = 'input window, operand 0']
    #allocation3 [shape = 's32[2]{0}', space=sflag, size = 0x8, scoped, tag = 'scoped memory for tpu_custom_call.1']
    #allocation4 [shape = 's32[2]{0}', space=sflag, size = 0x8, scoped, tag = 'scoped memory for tpu_custom_call.1']
    #allocation5 [shape = 'u8[65536]{0}', space=vmem, size = 0x10000, scoped, tag = 'input window, operand 1, single buffered']
    #allocation6 [shape = 's32[1]{0}', space=sflag, size = 0x4, scoped, tag = 'scoped memory for tpu_custom_call.1']
    #allocation7 [shape = 'u8[1024]{0}', space=vmem, size = 0x400, scoped, tag = 'input window, operand 2, single buffered']
    #allocation8 [shape = 'u8[65536]{0}', space=vmem, size = 0x10000, scoped, tag = 'input window, operand 3, single buffered']
    #allocation9 [shape = 's32[1]{0}', space=sflag, size = 0x4, scoped, tag = 'scoped memory for tpu_custom_call.1']
    #allocation10 [shape = 'u8[32768]{0}', space=vmem, size = 0x8000, scoped, tag = 'output window, operand 0']
    %10 = vsyncpa [#allocation3], 0
    %s11 = scalar_lea.sflag [#allocation3], 1
    %12 = vsyncpa %s11, 0
    %13 = vsyncpa [#allocation6], 0
    %14 = vsyncpa [#allocation9], 0
    %15 = vsyncpa [#allocation4], 0
    %s16 = scalar_lea.sflag [#allocation4], 1
    %17 = vsyncpa %s16, 0
    loop: start=0, step=1, limit=4
    $region2: #{tpu_custom_call.1} parent=1 // loop_pre_header
      _
    $region3: #{tpu_custom_call.1} parent=1 // loop_header
      %s19 = sphi 0, %s23
      %p20 = scmp.ge.s32.totalorder %s19, 4
      %s29 = sphi 0, %s31
      %s32 = sphi 0, %s29
      %s33 = sphi 0, %s32
      %s49 = sphi 0, %s33
      %s53 = sphi 0, %s53
      %s55 = sphi 0, %s53
      %s56 = sphi 0, %s55
      %s70 = sphi 0, %s56
      %s74 = sphi 0, %s74
      %s76 = sphi 0, %s74
      %s77 = sphi 0, %s76
      %s91 = sphi 0, %s77
      %s95 = sphi 0, %s95
      %s97 = sphi 0, %s95
      %s98 = sphi 0, %s97
      %s112 = sphi 0, %s98
      %s116 = sphi 0, %s116
      %s118 = sphi 0, %s116
      %s119 = sphi 0, %s118
      %s133 = sphi 0, %s119
      %s139 = sphi 0, %s141
      %s142 = sphi 0, %s139
      %s143 = sphi 0, %s142
      %s159 = sphi 0, %s143
    $region4: #{tpu_custom_call.1} parent=1 // loop_header_branch
      %22 = sbr.rel (%p20) target = $region8
    $region5: #{tpu_custom_call.1} parent=1 // loop_body
      %s24 = ssub.s32 %s19, 1
      %s25 = ssub.s32 %s19, 2
      %s26 = sadd.s32 %s19, 1
      %s27 = ssub.s32 %s19, %s26
      %p28 = scmp.eq.s32.totalorder %s27, 0
      %s30 = sadd.s32 %s29, 1
      %s31 = scalar_select %p28, %s29, %s30
      %p34 = pneg %p28
      %p35 = scmp.eq.s32.totalorder %s19, 1
      %p36 = por %p34, %p35
      %p37 = scmp.ne.s32.totalorder %s29, %s32
      %p38 = scmp.eq.s32.totalorder %s19, 0
      %p39 = por %p37, %p38
      %p40 = scmp.ne.s32.totalorder %s29, %s32
      %p41 = scmp.eq.s32.totalorder %s24, 1
      %p42 = por %p40, %p41
      %p43 = scmp.ne.s32.totalorder %s32, %s33
      %p44 = scmp.eq.s32.totalorder %s24, 0
      %p45 = por %p43, %p44
      %p46 = scmp.ne.s32.totalorder %s32, %s33
      %p47 = scmp.eq.s32.totalorder %s25, 1
      %p48 = por %p46, %p47
      %p50 = scmp.ne.s32.totalorder %s33, %s49
      %p51 = scmp.eq.s32.totalorder %s25, 0
      %p52 = por %p50, %p51
      %s54 = sadd.s32 %s53, 1
      %p57 = scmp.eq.s32.totalorder %s19, 1
      %p58 = scmp.ne.s32.totalorder %s53, %s55
      %p59 = scmp.eq.s32.totalorder %s19, 0
      %p60 = por %p58, %p59
      %p61 = scmp.ne.s32.totalorder %s53, %s55
      %p62 = scmp.eq.s32.totalorder %s24, 1
      %p63 = por %p61, %p62
      %p64 = scmp.ne.s32.totalorder %s55, %s56
      %p65 = scmp.eq.s32.totalorder %s24, 0
      %p66 = por %p64, %p65
      %p67 = scmp.ne.s32.totalorder %s55, %s56
      %p68 = scmp.eq.s32.totalorder %s25, 1
      %p69 = por %p67, %p68
      %p71 = scmp.ne.s32.totalorder %s56, %s70
      %p72 = scmp.eq.s32.totalorder %s25, 0
      %p73 = por %p71, %p72
      %s75 = sadd.s32 %s74, 1
      %p78 = scmp.eq.s32.totalorder %s19, 1
      %p79 = scmp.ne.s32.totalorder %s74, %s76
      %p80 = scmp.eq.s32.totalorder %s19, 0
      %p81 = por %p79, %p80
      %p82 = scmp.ne.s32.totalorder %s74, %s76
      %p83 = scmp.eq.s32.totalorder %s24, 1
      %p84 = por %p82, %p83
      %p85 = scmp.ne.s32.totalorder %s76, %s77
      %p86 = scmp.eq.s32.totalorder %s24, 0
      %p87 = por %p85, %p86
      %p88 = scmp.ne.s32.totalorder %s76, %s77
      %p89 = scmp.eq.s32.totalorder %s25, 1
      %p90 = por %p88, %p89
      %p92 = scmp.ne.s32.totalorder %s77, %s91
      %p93 = scmp.eq.s32.totalorder %s25, 0
      %p94 = por %p92, %p93
      %s96 = sadd.s32 %s95, 1
      %p99 = scmp.eq.s32.totalorder %s19, 1
      %p100 = scmp.ne.s32.totalorder %s95, %s97
      %p101 = scmp.eq.s32.totalorder %s19, 0
      %p102 = por %p100, %p101
      %p103 = scmp.ne.s32.totalorder %s95, %s97
      %p104 = scmp.eq.s32.totalorder %s24, 1
      %p105 = por %p103, %p104
      %p106 = scmp.ne.s32.totalorder %s97, %s98
      %p107 = scmp.eq.s32.totalorder %s24, 0
      %p108 = por %p106, %p107
      %p109 = scmp.ne.s32.totalorder %s97, %s98
      %p110 = scmp.eq.s32.totalorder %s25, 1
      %p111 = por %p109, %p110
      %p113 = scmp.ne.s32.totalorder %s98, %s112
      %p114 = scmp.eq.s32.totalorder %s25, 0
      %p115 = por %p113, %p114
      %s117 = sadd.s32 %s116, 1
      %p120 = scmp.eq.s32.totalorder %s19, 1
      %p121 = scmp.ne.s32.totalorder %s116, %s118
      %p122 = scmp.eq.s32.totalorder %s19, 0
      %p123 = por %p121, %p122
      %p124 = scmp.ne.s32.totalorder %s116, %s118
      %p125 = scmp.eq.s32.totalorder %s24, 1
      %p126 = por %p124, %p125
      %p127 = scmp.ne.s32.totalorder %s118, %s119
      %p128 = scmp.eq.s32.totalorder %s24, 0
      %p129 = por %p127, %p128
      %p130 = scmp.ne.s32.totalorder %s118, %s119
      %p131 = scmp.eq.s32.totalorder %s25, 1
      %p132 = por %p130, %p131
      %p134 = scmp.ne.s32.totalorder %s119, %s133
      %p135 = scmp.eq.s32.totalorder %s25, 0
      %p136 = por %p134, %p135
      %s137 = ssub.s32 %s19, %s26
      %p138 = scmp.eq.s32.totalorder %s137, 0
      %s140 = sadd.s32 %s139, 1
      %s141 = scalar_select %p138, %s139, %s140
      %p144 = pneg %p138
      %p145 = scmp.eq.s32.totalorder %s19, 1
      %p146 = por %p144, %p145
      %p147 = scmp.ne.s32.totalorder %s139, %s142
      %p148 = scmp.eq.s32.totalorder %s19, 0
      %p149 = por %p147, %p148
      %p150 = scmp.ne.s32.totalorder %s139, %s142
      %p151 = scmp.eq.s32.totalorder %s24, 1
      %p152 = por %p150, %p151
      %p153 = scmp.ne.s32.totalorder %s142, %s143
      %p154 = scmp.eq.s32.totalorder %s24, 0
      %p155 = por %p153, %p154
      %p156 = scmp.ne.s32.totalorder %s142, %s143
      %p157 = scmp.eq.s32.totalorder %s25, 1
      %p158 = por %p156, %p157
      %p160 = scmp.ne.s32.totalorder %s143, %s159
      %p161 = scmp.eq.s32.totalorder %s25, 0
      %p162 = por %p160, %p161
      %p163 = scmp.le.s32.totalorder 1, %s19
      %p164 = scmp.lt.s32.totalorder %s19, 3
      %p165 = pnand %p163, %p164
      %p166 = pneg %p165
      // Predicated region
      $region9: #{tpu_custom_call.1} parent=5 // pred_check
        _
      $region10: #{tpu_custom_call.1} parent=5 // pred_check_branch
        %168 = sbr.rel (%p165) target = $region12
      $region11: #{tpu_custom_call.1} parent=5 // pred_region
        %s169 = ssub.s32 %s19, 1
        // Predicated region
        $region13: #{tpu_custom_call.1} parent=11 // pred_check
          %p170 = pneg %p66
        $region14: #{tpu_custom_call.1} parent=11 // pred_check_branch
          %172 = sbr.rel (%p170) target = $region16
        $region15: #{tpu_custom_call.1} parent=11 // pred_region
          %174 = vsyncadd [#allocation6], 0
          %s175 = sshll.u32 %s1, 4
          %s176 = int_to_ptr.hbm [resolvable:$true] %s175
          %s177 = sshll.u32 [#allocation5], 4
          %s178 = int_to_ptr.vmem [resolvable:$true] %s177
          %183 = dma.hbm_to_vmem [thread:$0]  %s176, 2048, %s178, [#allocation6], 128, 128, 8
        $region16: #{tpu_custom_call.1} parent=11 // pred_fallthru
          _
        // Predicated region
        $region17: #{tpu_custom_call.1} parent=11 // pred_check
          %p184 = pneg %p87
        $region18: #{tpu_custom_call.1} parent=11 // pred_check_branch
          %186 = sbr.rel (%p184) target = $region20
        $region19: #{tpu_custom_call.1} parent=11 // pred_region
          %188 = vsyncadd [#allocation6], 0
          %s190 = sshll.u32 %s2, 4
          %s191 = int_to_ptr.hbm [resolvable:$true] %s190
          %s192 = sshll.u32 [#allocation7], 4
          %s193 = int_to_ptr.vmem [resolvable:$true] %s192
          %195 = dma.hbm_to_vmem [thread:$0]  %s191, 32, %s193, [#allocation6]
        $region20: #{tpu_custom_call.1} parent=11 // pred_fallthru
          _
        // Predicated region
        $region21: #{tpu_custom_call.1} parent=11 // pred_check
          %p196 = pneg %p108
        $region22: #{tpu_custom_call.1} parent=11 // pred_check_branch
          %198 = sbr.rel (%p196) target = $region24
        $region23: #{tpu_custom_call.1} parent=11 // pred_region
          %200 = vsyncadd [#allocation9], 0
          %s201 = sshll.u32 %s3, 4
          %s202 = int_to_ptr.hbm [resolvable:$true] %s201
          %s203 = sshll.u32 [#allocation8], 4
          %s204 = int_to_ptr.vmem [resolvable:$true] %s203
          %209 = dma.hbm_to_vmem [thread:$0]  %s202, 2048, %s204, [#allocation9], 64, 64, 4
        $region24: #{tpu_custom_call.1} parent=11 // pred_fallthru
          _
        // Predicated region
        $region25: #{tpu_custom_call.1} parent=11 // pred_check
          %p210 = pneg %p129
        $region26: #{tpu_custom_call.1} parent=11 // pred_check_branch
          %212 = sbr.rel (%p210) target = $region28
        $region27: #{tpu_custom_call.1} parent=11 // pred_region
          _
        $region28: #{tpu_custom_call.1} parent=11 // pred_fallthru
          _
      $region12: #{tpu_custom_call.1} parent=5 // pred_fallthru
        _
      %p213 = scmp.lt.s32.totalorder %s19, 2
      // Predicated region
      $region29: #{tpu_custom_call.1} parent=5 // pred_check
        %p214 = pneg %p213
      $region30: #{tpu_custom_call.1} parent=5 // pred_check_branch
        %216 = sbr.rel (%p214) target = $region32
      $region31: #{tpu_custom_call.1} parent=5 // pred_region
        // Predicated region
        $region33: #{tpu_custom_call.1} parent=31 // pred_check
          %p217 = pneg %p39
        $region34: #{tpu_custom_call.1} parent=31 // pred_check_branch
          %219 = sbr.rel (%p217) target = $region36
        $region35: #{tpu_custom_call.1} parent=31 // pred_region
          %s220 = sand.u32 %s29, 1
          %s221 = scalar_lea.sflag [#allocation3], %s220
          %s222 = sand.u32 %s29, 1
          %s223 = smul.addr %s222, 16
          %s224 = scalar_lea.vmem [#allocation2], %s223
          %s225 = smul.u32 4, %s19
          %s226 = ssub.s32 6, %s225
          %p227 = scmp.lt.s32.totalorder %s226, 4
          %s228 = scalar_select %p227, %s226, 4
          %s229 = smul.u32 4, %s228
          %s230 = ssub.s32 16, %s229
          %s231 = sshll.u32 %s230, 4
          %232 = vsyncadd %s221, %s231
          %p233 = scmp.ne.s32.totalorder 0, %s229
          %s234 = smul.addr %s225, 4
          %s235 = scalar_lea.hbm %s0, %s234
          %s236 = smul.u32 4, %s228
          %s237 = sshll.u32 %s235, 4
          %s238 = int_to_ptr.hbm [resolvable:$true] %s237
          %s239 = sshll.u32 %s224, 4
          %s240 = int_to_ptr.vmem [resolvable:$true] %s239
          %s241 = sshll.u32 %s236, 4
          %245 = dma.hbm_to_vmem [thread:$0]  (%p233), %s238, %s241, %s240, %s221, 64, 64, 4
        $region36: #{tpu_custom_call.1} parent=31 // pred_fallthru
          _
      $region32: #{tpu_custom_call.1} parent=5 // pred_fallthru
        _
      %p246 = scmp.le.s32.totalorder 1, %s19
      %p247 = scmp.lt.s32.totalorder %s19, 3
      %p248 = pnand %p246, %p247
      %p249 = pneg %p248
      // Predicated region
      $region37: #{tpu_custom_call.1} parent=5 // pred_check
        _
      $region38: #{tpu_custom_call.1} parent=5 // pred_check_branch
        %251 = sbr.rel (%p248) target = $region40
      $region39: #{tpu_custom_call.1} parent=5 // pred_region
        %s252 = ssub.s32 %s19, 1
        %s253 = sand.u32 %s32, 1
        %s254 = scalar_lea.sflag [#allocation3], %s253
        %s255 = sand.u32 %s32, 1
        %s256 = smul.addr %s255, 16
        %s257 = scalar_lea.vmem [#allocation2], %s256
        // Predicated region
        $region41: #{tpu_custom_call.1} parent=39 // pred_check
          %p258 = pneg %p45
        $region42: #{tpu_custom_call.1} parent=39 // pred_check_branch
          %260 = sbr.rel (%p258) target = $region44
        $region43: #{tpu_custom_call.1} parent=39 // pred_region
          %262 = dma.done %s254, 256
        $region44: #{tpu_custom_call.1} parent=39 // pred_fallthru
          _
        // Predicated region
        $region45: #{tpu_custom_call.1} parent=39 // pred_check
          %p263 = pneg %p66
        $region46: #{tpu_custom_call.1} parent=39 // pred_check_branch
          %265 = sbr.rel (%p263) target = $region48
        $region47: #{tpu_custom_call.1} parent=39 // pred_region
          %267 = dma.done [#allocation6], 2048
        $region48: #{tpu_custom_call.1} parent=39 // pred_fallthru
          _
        // Predicated region
        $region49: #{tpu_custom_call.1} parent=39 // pred_check
          %p268 = pneg %p87
        $region50: #{tpu_custom_call.1} parent=39 // pred_check_branch
          %270 = sbr.rel (%p268) target = $region52
        $region51: #{tpu_custom_call.1} parent=39 // pred_region
          %272 = dma.done [#allocation6], 32
        $region52: #{tpu_custom_call.1} parent=39 // pred_fallthru
          _
        // Predicated region
        $region53: #{tpu_custom_call.1} parent=39 // pred_check
          %p273 = pneg %p108
        $region54: #{tpu_custom_call.1} parent=39 // pred_check_branch
          %275 = sbr.rel (%p273) target = $region56
        $region55: #{tpu_custom_call.1} parent=39 // pred_region
          %277 = dma.done [#allocation9], 2048
        $region56: #{tpu_custom_call.1} parent=39 // pred_fallthru
          _
        %s278 = sand.u32 %s32, 1
        %s279 = scalar_lea.sflag [#allocation3], %s278
        %s280 = sand.u32 %s32, 1
        %s281 = smul.addr %s280, 16
        %s282 = scalar_lea.vmem [#allocation2], %s281
        %p283 = pneg %p45
        %p284 = pneg %p42
        %p285 = pneg %p66
        %p286 = pneg %p63
        %p287 = pneg %p87
        %p288 = pneg %p84
        %p289 = pneg %p108
        %p290 = pneg %p105
        %p291 = pneg %p129
        %p292 = pneg %p126
        %p293 = pneg %p155
        %p294 = pneg %p152
        %s295 = sand.u32 %s142, 1
        %s296 = scalar_lea.sflag [#allocation4], %s295
        %s297 = sand.u32 %s142, 1
        %s298 = smul.addr %s297, 32
        %s299 = scalar_lea.vmem [#allocation10], %s298
        %s300 = smul.u32 4, %s24
        %s301 = ssub.s32 6, %s300
        %p302 = scmp.lt.s32.totalorder %s301, 4
        %s303 = scalar_select %p302, %s301, 4
        %s304 = smul.u32 4, %s303
        %s305 = smul.u32 4, %s24
        %s306 = ssub.s32 6, %s305
        %p307 = scmp.lt.s32.totalorder %s306, 4
        %s308 = scalar_select %p307, %s306, 4
        %s309 = smul.u32 8, %s308
        %v310 = vld [vmem:[%s257] sm:$0xf]
        %v311 = vld [vmem:[%s257 + $0x4] sm:$0xf]
        %v312 = vld [vmem:[%s257 + $0x8] sm:$0xf]
        %v313 = vld [vmem:[%s257 + $0xc] sm:$0xf]
        %v314 = vunpack.c.l.bf16 %v310
        %v315 = vunpack.c.l.bf16 %v311
        %v316 = vunpack.c.l.bf16 %v312
        %v317 = vunpack.c.l.bf16 %v313
        %vm318 = vcmp.ne.f32.partialorder %v314, 0.0
        %vm319 = vcmp.ne.f32.partialorder %v315, 0.0
        %vm320 = vcmp.ne.f32.partialorder %v316, 0.0
        %vm321 = vcmp.ne.f32.partialorder %v317, 0.0
        %v322 = vsel %vm318, 1.0, 0.0
        %v323 = vsel %vm319, 1.0, 0.0
        %v324 = vsel %vm320, 1.0, 0.0
        %v325 = vsel %vm321, 1.0, 0.0
        %326 = vmax.xlane.f32.xlu0 %v322
        %v327 = vpop.xlane.xlu0 %326
        %328 = vmax.xlane.f32.xlu0 %v323
        %v329 = vpop.xlane.xlu0 %328
        %330 = vmax.xlane.f32.xlu0 %v324
        %v331 = vpop.xlane.xlu0 %330
        %332 = vmax.xlane.f32.xlu0 %v325
        %v333 = vpop.xlane.xlu0 %332
        %vm334 = vcmp.gt.f32.partialorder %v327, 0.0
        %vm335 = vcmp.gt.f32.partialorder %v329, 0.0
        %vm336 = vcmp.gt.f32.partialorder %v331, 0.0
        %vm337 = vcmp.gt.f32.partialorder %v333, 0.0
        %v338 = vld [vmem:[#allocation5] sm:$0xff]
        %v339 = vld [vmem:[#allocation5 + $0x8] sm:$0xff]
        %v340 = vld [vmem:[#allocation5 + $0x10] sm:$0xff]
        %v341 = vld [vmem:[#allocation5 + $0x18] sm:$0xff]
        %v342 = vld [vmem:[#allocation5 + $0x20] sm:$0xff]
        %v343 = vld [vmem:[#allocation5 + $0x28] sm:$0xff]
        %v344 = vld [vmem:[#allocation5 + $0x30] sm:$0xff]
        %v345 = vld [vmem:[#allocation5 + $0x38] sm:$0xff]
        %v346 = vld [vmem:[#allocation5 + $0x40] sm:$0xff]
        %v347 = vld [vmem:[#allocation5 + $0x48] sm:$0xff]
        %v348 = vld [vmem:[#allocation5 + $0x50] sm:$0xff]
        %v349 = vld [vmem:[#allocation5 + $0x58] sm:$0xff]
        %v350 = vld [vmem:[#allocation5 + $0x60] sm:$0xff]
        %v351 = vld [vmem:[#allocation5 + $0x68] sm:$0xff]
        %v352 = vld [vmem:[#allocation5 + $0x70] sm:$0xff]
        %v353 = vld [vmem:[#allocation5 + $0x78] sm:$0xff]
        %v354 = vld [vmem:[#allocation7] sm:$0x3]
        %v356 = vperm.slane %v354, 0
        %v357 = vperm.slane %v354, 1
        %v364 = vunpack.c.l.b16 %v310
        %v365 = vunpack.c.l.b16 %v311
        %v366 = vunpack.c.l.b16 %v312
        %v367 = vunpack.c.l.b16 %v313
        %v368 = vpack.c.b16 %v365, %v364
        %v369 = vpack.c.b16 %v367, %v366
        %v388 = vunpack.c.l.b16 %v338
        %v389 = vunpack.c.h.b16 %v338
        %v390 = vunpack.c.l.b16 %v339
        %v391 = vunpack.c.h.b16 %v339
        %v392 = vunpack.c.l.b16 %v340
        %v393 = vunpack.c.h.b16 %v340
        %v394 = vunpack.c.l.b16 %v341
        %v395 = vunpack.c.h.b16 %v341
        %v396 = vunpack.c.l.b16 %v342
        %v397 = vunpack.c.h.b16 %v342
        %v398 = vunpack.c.l.b16 %v343
        %v399 = vunpack.c.h.b16 %v343
        %v400 = vunpack.c.l.b16 %v344
        %v401 = vunpack.c.h.b16 %v344
        %v402 = vunpack.c.l.b16 %v345
        %v403 = vunpack.c.h.b16 %v345
        %v404 = vunpack.c.l.b16 %v346
        %v405 = vunpack.c.h.b16 %v346
        %v406 = vunpack.c.l.b16 %v347
        %v407 = vunpack.c.h.b16 %v347
        %v408 = vunpack.c.l.b16 %v348
        %v409 = vunpack.c.h.b16 %v348
        %v410 = vunpack.c.l.b16 %v349
        %v411 = vunpack.c.h.b16 %v349
        %v412 = vunpack.c.l.b16 %v350
        %v413 = vunpack.c.h.b16 %v350
        %v414 = vunpack.c.l.b16 %v351
        %v415 = vunpack.c.h.b16 %v351
        %v416 = vunpack.c.l.b16 %v352
        %v417 = vunpack.c.h.b16 %v352
        %v418 = vunpack.c.l.b16 %v353
        %v419 = vunpack.c.h.b16 %v353
        %v420 = vpack.c.b16 %v390, %v388
        %v421 = vpack.c.b16 %v391, %v389
        %v422 = vpack.c.b16 %v394, %v392
        %v423 = vpack.c.b16 %v395, %v393
        %v424 = vpack.c.b16 %v398, %v396
        %v425 = vpack.c.b16 %v399, %v397
        %v426 = vpack.c.b16 %v402, %v400
        %v427 = vpack.c.b16 %v403, %v401
        %v428 = vpack.c.b16 %v406, %v404
        %v429 = vpack.c.b16 %v407, %v405
        %v430 = vpack.c.b16 %v410, %v408
        %v431 = vpack.c.b16 %v411, %v409
        %v432 = vpack.c.b16 %v414, %v412
        %v433 = vpack.c.b16 %v415, %v413
        %v434 = vpack.c.b16 %v418, %v416
        %v435 = vpack.c.b16 %v419, %v417
        %452 = vmatpush.bf16.msra.mxu0 %v434
        %453 = vmatpush.bf16.msra.mxu0 %v432
        %454 = vmatpush.bf16.msra.mxu0 %v430
        %455 = vmatpush.bf16.msra.mxu0 %v428
        %456 = vmatpush.bf16.msra.mxu0 %v426
        %457 = vmatpush.bf16.msra.mxu0 %v424
        %458 = vmatpush.bf16.msra.mxu0 %v422
        %459 = vmatpush.bf16.msra.mxu0 %v420
        %460 = vmatmul.bf16.gmra.mxu0 %v368
        %v461 = vpop.f32.mrf.mxu0
        %v462 = vadd.f32 %v356, %v461
        %v463 = vpop.f32.mrf.mxu0
        %v464 = vadd.f32 %v356, %v463
        %465 = vmatmul.bf16.gmra.mxu0 %v369
        %v466 = vpop.f32.mrf.mxu0
        %v467 = vadd.f32 %v356, %v466
        %v468 = vpop.f32.mrf.mxu0
        %v469 = vadd.f32 %v356, %v468
        %470 = vdwg.mxu0
        %471 = vmatpush.bf16.msra.mxu0 %v435
        %472 = vmatpush.bf16.msra.mxu0 %v433
        %473 = vmatpush.bf16.msra.mxu0 %v431
        %474 = vmatpush.bf16.msra.mxu0 %v429
        %475 = vmatpush.bf16.msra.mxu0 %v427
        %476 = vmatpush.bf16.msra.mxu0 %v425
        %477 = vmatpush.bf16.msra.mxu0 %v423
        %478 = vmatpush.bf16.msra.mxu0 %v421
        %479 = vmatmul.bf16.gmra.mxu0 %v368
        %v480 = vpop.f32.mrf.mxu0
        %v481 = vadd.f32 %v357, %v480
        %v482 = vpop.f32.mrf.mxu0
        %v483 = vadd.f32 %v357, %v482
        %484 = vmatmul.bf16.gmra.mxu0 %v369
        %v485 = vpop.f32.mrf.mxu0
        %v486 = vadd.f32 %v357, %v485
        %v487 = vpop.f32.mrf.mxu0
        %v488 = vadd.f32 %v357, %v487
        %489 = vdwg.mxu0
        %v490 = vmax.f32 %v462, 0.0
        %v491 = vmax.f32 %v481, 0.0
        %v492 = vmax.f32 %v464, 0.0
        %v493 = vmax.f32 %v483, 0.0
        %v494 = vmax.f32 %v467, 0.0
        %v495 = vmax.f32 %v486, 0.0
        %v496 = vmax.f32 %v469, 0.0
        %v497 = vmax.f32 %v488, 0.0
        %v498 = vpack.c.bf16 %v492, %v490
        %v499 = vpack.c.bf16 %v493, %v491
        %v500 = vpack.c.bf16 %v496, %v494
        %v501 = vpack.c.bf16 %v497, %v495
        %v502 = vld [vmem:[#allocation8] sm:$0xf]
        %v503 = vld [vmem:[#allocation8 + $0x4] sm:$0xf]
        %v504 = vld [vmem:[#allocation8 + $0x8] sm:$0xf]
        %v505 = vld [vmem:[#allocation8 + $0xc] sm:$0xf]
        %v506 = vld [vmem:[#allocation8 + $0x10] sm:$0xf]
        %v507 = vld [vmem:[#allocation8 + $0x14] sm:$0xf]
        %v508 = vld [vmem:[#allocation8 + $0x18] sm:$0xf]
        %v509 = vld [vmem:[#allocation8 + $0x1c] sm:$0xf]
        %v510 = vld [vmem:[#allocation8 + $0x20] sm:$0xf]
        %v511 = vld [vmem:[#allocation8 + $0x24] sm:$0xf]
        %v512 = vld [vmem:[#allocation8 + $0x28] sm:$0xf]
        %v513 = vld [vmem:[#allocation8 + $0x2c] sm:$0xf]
        %v514 = vld [vmem:[#allocation8 + $0x30] sm:$0xf]
        %v515 = vld [vmem:[#allocation8 + $0x34] sm:$0xf]
        %v516 = vld [vmem:[#allocation8 + $0x38] sm:$0xf]
        %v517 = vld [vmem:[#allocation8 + $0x3c] sm:$0xf]
        %v518 = vld [vmem:[#allocation8 + $0x40] sm:$0xf]
        %v519 = vld [vmem:[#allocation8 + $0x44] sm:$0xf]
        %v520 = vld [vmem:[#allocation8 + $0x48] sm:$0xf]
        %v521 = vld [vmem:[#allocation8 + $0x4c] sm:$0xf]
        %v522 = vld [vmem:[#allocation8 + $0x50] sm:$0xf]
        %v523 = vld [vmem:[#allocation8 + $0x54] sm:$0xf]
        %v524 = vld [vmem:[#allocation8 + $0x58] sm:$0xf]
        %v525 = vld [vmem:[#allocation8 + $0x5c] sm:$0xf]
        %v526 = vld [vmem:[#allocation8 + $0x60] sm:$0xf]
        %v527 = vld [vmem:[#allocation8 + $0x64] sm:$0xf]
        %v528 = vld [vmem:[#allocation8 + $0x68] sm:$0xf]
        %v529 = vld [vmem:[#allocation8 + $0x6c] sm:$0xf]
        %v530 = vld [vmem:[#allocation8 + $0x70] sm:$0xf]
        %v531 = vld [vmem:[#allocation8 + $0x74] sm:$0xf]
        %v532 = vld [vmem:[#allocation8 + $0x78] sm:$0xf]
        %v533 = vld [vmem:[#allocation8 + $0x7c] sm:$0xf]
        %v534 = vld [vmem:[%s4] sm:$0x1]
        %v536 = vperm.slane %v534, 0
        %v570 = vunpack.c.l.b16 %v502
        %v571 = vunpack.c.l.b16 %v503
        %v572 = vunpack.c.l.b16 %v504
        %v573 = vunpack.c.l.b16 %v505
        %v574 = vunpack.c.l.b16 %v506
        %v575 = vunpack.c.l.b16 %v507
        %v576 = vunpack.c.l.b16 %v508
        %v577 = vunpack.c.l.b16 %v509
        %v578 = vunpack.c.l.b16 %v510
        %v579 = vunpack.c.l.b16 %v511
        %v580 = vunpack.c.l.b16 %v512
        %v581 = vunpack.c.l.b16 %v513
        %v582 = vunpack.c.l.b16 %v514
        %v583 = vunpack.c.l.b16 %v515
        %v584 = vunpack.c.l.b16 %v516
        %v585 = vunpack.c.l.b16 %v517
        %v586 = vunpack.c.l.b16 %v518
        %v587 = vunpack.c.l.b16 %v519
        %v588 = vunpack.c.l.b16 %v520
        %v589 = vunpack.c.l.b16 %v521
        %v590 = vunpack.c.l.b16 %v522
        %v591 = vunpack.c.l.b16 %v523
        %v592 = vunpack.c.l.b16 %v524
        %v593 = vunpack.c.l.b16 %v525
        %v594 = vunpack.c.l.b16 %v526
        %v595 = vunpack.c.l.b16 %v527
        %v596 = vunpack.c.l.b16 %v528
        %v597 = vunpack.c.l.b16 %v529
        %v598 = vunpack.c.l.b16 %v530
        %v599 = vunpack.c.l.b16 %v531
        %v600 = vunpack.c.l.b16 %v532
        %v601 = vunpack.c.l.b16 %v533
        %v602 = vpack.c.b16 %v571, %v570
        %v603 = vpack.c.b16 %v573, %v572
        %v604 = vpack.c.b16 %v575, %v574
        %v605 = vpack.c.b16 %v577, %v576
        %v606 = vpack.c.b16 %v579, %v578
        %v607 = vpack.c.b16 %v581, %v580
        %v608 = vpack.c.b16 %v583, %v582
        %v609 = vpack.c.b16 %v585, %v584
        %v610 = vpack.c.b16 %v587, %v586
        %v611 = vpack.c.b16 %v589, %v588
        %v612 = vpack.c.b16 %v591, %v590
        %v613 = vpack.c.b16 %v593, %v592
        %v614 = vpack.c.b16 %v595, %v594
        %v615 = vpack.c.b16 %v597, %v596
        %v616 = vpack.c.b16 %v599, %v598
        %v617 = vpack.c.b16 %v601, %v600
        %634 = vmatpush.bf16.msra.mxu0 %v609
        %635 = vmatpush.bf16.msra.mxu0 %v608
        %636 = vmatpush.bf16.msra.mxu0 %v607
        %637 = vmatpush.bf16.msra.mxu0 %v606
        %638 = vmatpush.bf16.msra.mxu0 %v605
        %639 = vmatpush.bf16.msra.mxu0 %v604
        %640 = vmatpush.bf16.msra.mxu0 %v603
        %641 = vmatpush.bf16.msra.mxu0 %v602
        %642 = vmatmul.bf16.gmra.mxu0 %v498
        %v643 = vpop.f32.mrf.mxu0
        %v644 = vadd.f32 %v536, %v643
        %v645 = vpop.f32.mrf.mxu0
        %v646 = vadd.f32 %v536, %v645
        %647 = vmatmul.bf16.gmra.mxu0 %v500
        %v648 = vpop.f32.mrf.mxu0
        %v649 = vadd.f32 %v536, %v648
        %v650 = vpop.f32.mrf.mxu0
        %v651 = vadd.f32 %v536, %v650
        %652 = vdwg.mxu0
        %653 = vmatpush.bf16.msra.mxu0 %v617
        %654 = vmatpush.bf16.msra.mxu0 %v616
        %655 = vmatpush.bf16.msra.mxu0 %v615
        %656 = vmatpush.bf16.msra.mxu0 %v614
        %657 = vmatpush.bf16.msra.mxu0 %v613
        %658 = vmatpush.bf16.msra.mxu0 %v612
        %659 = vmatpush.bf16.msra.mxu0 %v611
        %660 = vmatpush.bf16.msra.mxu0 %v610
        %661 = vmatmul.bf16.gmra.mxu0 %v499
        %v662 = vpop.f32.mrf.mxu0
        %v663 = vadd.f32 %v644, %v662
        %v664 = vpop.f32.mrf.mxu0
        %v665 = vadd.f32 %v646, %v664
        %666 = vmatmul.bf16.gmra.mxu0 %v501
        %v667 = vpop.f32.mrf.mxu0
        %v668 = vadd.f32 %v649, %v667
        %v669 = vpop.f32.mrf.mxu0
        %v670 = vadd.f32 %v651, %v669
        %671 = vdwg.mxu0
        %v672 = vsel %vm334, 1, 0
        %v673 = vsel %vm335, 1, 0
        %v674 = vsel %vm336, 1, 0
        %v675 = vsel %vm337, 1, 0
        %vm676 = vcmp.eq.s32.totalorder %v672, 1
        %vm677 = vcmp.eq.s32.totalorder %v673, 1
        %vm678 = vcmp.eq.s32.totalorder %v674, 1
        %vm679 = vcmp.eq.s32.totalorder %v675, 1
        %v680 = vsel %vm676, %v663, 0.0
        %v681 = vsel %vm677, %v665, 0.0
        %v682 = vsel %vm678, %v668, 0.0
        %v683 = vsel %vm679, %v670, 0.0
        %684 = vst [vmem:[%s299] sm:$0xff] %v680
        %685 = vst [vmem:[%s299 + $0x8] sm:$0xff] %v681
        %686 = vst [vmem:[%s299 + $0x10] sm:$0xff] %v682
        %687 = vst [vmem:[%s299 + $0x18] sm:$0xff] %v683
        %s688 = sand.u32 %s142, 1
        %s689 = scalar_lea.sflag [#allocation4], %s688
        %s690 = sand.u32 %s142, 1
        %s691 = smul.addr %s690, 32
        %s692 = scalar_lea.vmem [#allocation10], %s691
        // Predicated region
        $region57: #{tpu_custom_call.1} parent=39 // pred_check
          %p693 = pneg %p152
        $region58: #{tpu_custom_call.1} parent=39 // pred_check_branch
          %695 = sbr.rel (%p693) target = $region60
        $region59: #{tpu_custom_call.1} parent=39 // pred_region
          %s696 = smul.u32 4, %s24
          %s697 = ssub.s32 6, %s696
          %p698 = scmp.lt.s32.totalorder %s697, 4
          %s699 = scalar_select %p698, %s697, 4
          %s700 = smul.u32 8, %s699
          %s701 = ssub.s32 32, %s700
          %s702 = sshll.u32 %s701, 4
          %703 = vsyncadd %s689, %s702
          %p704 = scmp.ne.s32.totalorder 0, %s700
          %s705 = smul.addr %s696, 8
          %s706 = scalar_lea.hbm %s5, %s705
          %s707 = smul.u32 8, %s699
          %s708 = sshll.u32 %s692, 4
          %s709 = int_to_ptr.vmem [resolvable:$true] %s708
          %s710 = sshll.u32 %s706, 4
          %s711 = int_to_ptr.hbm [resolvable:$true] %s710
          %s712 = sshll.u32 %s707, 4
          %716 = dma.vmem_to_hbm [thread:$0]  (%p704), %s709, %s712, %s711, %s689, 128, 128, 8
        $region60: #{tpu_custom_call.1} parent=39 // pred_fallthru
          _
      $region40: #{tpu_custom_call.1} parent=5 // pred_fallthru
        _
      %p717 = scmp.le.s32.totalorder 2, %s19
      // Predicated region
      $region61: #{tpu_custom_call.1} parent=5 // pred_check
        %p718 = pneg %p717
      $region62: #{tpu_custom_call.1} parent=5 // pred_check_branch
        %720 = sbr.rel (%p718) target = $region64
      $region63: #{tpu_custom_call.1} parent=5 // pred_region
        %s721 = ssub.s32 %s19, 2
        // Predicated region
        $region65: #{tpu_custom_call.1} parent=63 // pred_check
          %p722 = pneg %p158
        $region66: #{tpu_custom_call.1} parent=63 // pred_check_branch
          %724 = sbr.rel (%p722) target = $region68
        $region67: #{tpu_custom_call.1} parent=63 // pred_region
          %s725 = sand.u32 %s143, 1
          %s726 = scalar_lea.sflag [#allocation4], %s725
          %s727 = sand.u32 %s143, 1
          %s728 = smul.addr %s727, 32
          %s729 = scalar_lea.vmem [#allocation10], %s728
          %731 = dma.done %s726, 512
        $region68: #{tpu_custom_call.1} parent=63 // pred_fallthru
          _
      $region64: #{tpu_custom_call.1} parent=5 // pred_fallthru
        _
    $region6: #{tpu_custom_call.1} parent=1 // loop_footer
      %s23 = sadd.s32 1, %s19
    $region7: #{tpu_custom_call.1} parent=1 // loop_footer_branch
      %18 = sbr.rel target = $region3
    $region8: #{tpu_custom_call.1} parent=1 // loop_exit
      _
    %732 = vsyncpa [#allocation3], 1
    %s733 = scalar_lea.sflag [#allocation3], 1
    %734 = vsyncpa %s733, 1
    %735 = vsyncpa [#allocation6], 1
    %736 = vsyncpa [#allocation9], 1
    %737 = vsyncpa [#allocation4], 1
    %s738 = scalar_lea.sflag [#allocation4], 1
    %739 = vsyncpa %s738, 1

</llo_original>
